<compile_context>
chip_gen: v7x
topology: tpu7x:2x2x1
jax: 0.10.0
libtpu: 0.0.40
codegen_flags: <defaults>
</compile_context>

<pallas_src>
import functools

import jax
import jax.numpy as jnp
from jax.experimental import pallas as pl
from jax.experimental.pallas import tpu as pltpu


def _round_up(x, m):
    return (x + m - 1) // m * m


def _pick_row_tile(h, w, n, target_rows=4096):
    """Largest TH dividing H with TH*W <= target_rows (keeps TM ~2-4K rows)."""
    th = 1
    for d in range(1, h + 1):
        if h % d == 0 and d * w <= target_rows:
            th = d
    # Keep at least two grid steps when N == 1 (v7x has 2 TensorCores).
    if n == 1 and th == h and h > 1:
        for d in range(h - 1, 0, -1):
            if h % d == 0:
                th = d
                break
    # Output block lane dim must be a multiple of 128 or span the full H*W.
    if th < h and (th * w) % 128 != 0:
        th = h
    return th


def _vmem_estimate_bytes(h, w, cin, cout, pad, tm):
    """Rough VMEM footprint (buffers are double-buffered by the pipeline)."""
    lane = 128
    x_buf = (h + 2 * pad) * _round_up(w + 2 * pad, 16) * lane * 2   # bf16, Cin->128 lanes
    o_buf = _round_up(cout, 8) * _round_up(tm, lane) * 4            # out tile
    patch = _round_up(tm, 16) * lane * 2                            # patch matrix (bf16)
    acc = _round_up(cout, 8) * _round_up(tm, lane) * 4              # f32 accumulator
    w_buf = _round_up(cout, 16) * lane * 2 + _round_up(cout, 8) * lane * 4
    return 2 * x_buf + 2 * o_buf + 4 * patch + 2 * acc + 2 * w_buf


def _twinconv_kernel(x_ref, w_ref, b_ref, o_ref, *, tile_h, width, cin, ksize):
    # x_ref: (1, H+2p, W+2p, Cin) bf16 -- whole padded image, resident per batch
    # w_ref: (Cout, K*K*Cin)      bf16 -- blended, transposed conv weights
    # b_ref: (Cout, 1)            f32  -- blended bias
    # o_ref: (1, Cout, TH*W)      out dtype, channel-major flattened spatial
    t = pl.program_id(1)
    row0 = pl.multiple_of(t * tile_h, tile_h)

    # In-kernel im2col: 9 static window slices of the resident image.
    pieces = []
    for kh in range(ksize):
        for kw in range(ksize):
            blk = x_ref[0, pl.ds(row0 + kh, tile_h), pl.ds(kw, width), :]
            pieces.append(blk.reshape(tile_h * width, cin))
    patch = jnp.concatenate(pieces, axis=-1)            # (TM, K*K*Cin) bf16

    # (Cout, K*K*Cin) x (TM, K*K*Cin)^T -> (Cout, TM), f32 accumulation.
    acc = jax.lax.dot_general(
        w_ref[...], patch,
        dimension_numbers=(((1,), (1,)), ((), ())),
        preferred_element_type=jnp.float32)
    o_ref[0] = (acc + b_ref[...]).astype(o_ref.dtype)


def twin_conv(x_nchw, w1, b1, w2, b2, r):
    """TwinConv forward.

    x_nchw: (N, Cin, H, W) float32
    w1, w2: (K, K, Cin, Cout) float32 (HWIO)
    b1, b2: (Cout,) float32
    r:      python float or 0-d array, blend factor
    returns (N, Cout, H, W) float32
    """
    N, Cin, H, W = x_nchw.shape
    K = w1.shape[0]
    Cout = w1.shape[-1]
    pad = (K - 1) // 2

    r = jnp.asarray(r, jnp.float32)
    # Fold the lerp into one weight/bias set (forward-exact).
    w_blend = (1.0 - r) * w1 + r * w2                   # (K, K, Cin, Cout)
    b_blend = (1.0 - r) * b1 + r * b2                   # (Cout,)

    # NCHW -> NHWC, zero-pad spatially ('SAME' for k=3/stride=1), cast bf16.
    x_nhwc = jnp.transpose(x_nchw, (0, 2, 3, 1)).astype(jnp.bfloat16)
    x_pad = jnp.pad(x_nhwc, ((0, 0), (pad, pad), (pad, pad), (0, 0)))

    kdim = K * K * Cin
    # (Cout, K*K*Cin) bf16; row order (kh, kw, cin) matches the kernel pieces.
    w_t = jnp.transpose(w_blend.reshape(kdim, Cout)).astype(jnp.bfloat16)
    b_col = b_blend.astype(jnp.float32).reshape(Cout, 1)

    tile_h = _pick_row_tile(H, W, N)
    tm = tile_h * W
    grid = (N, H // tile_h)

    vmem_est = _vmem_estimate_bytes(H, W, Cin, Cout, pad, tm)
    vmem_limit = int(min(max(2 * vmem_est, 32 * 1024 * 1024), 64 * 1024 * 1024))

    out_bytes = N * Cout * H * W * x_nchw.dtype.itemsize
    in_bytes = x_pad.size * 2 + w_t.size * 2 + b_col.size * 4

    out_flat = pl.pallas_call(
        functools.partial(_twinconv_kernel,
                          tile_h=tile_h, width=W, cin=Cin, ksize=K),
        out_shape=jax.ShapeDtypeStruct((N, Cout, H * W), x_nchw.dtype),
        grid_spec=pltpu.PrefetchScalarGridSpec(
            num_scalar_prefetch=0,
            grid=grid,
            in_specs=[
                # Whole padded image resident per batch (index ignores t).
                pl.BlockSpec((1, H + 2 * pad, W + 2 * pad, Cin),
                             lambda n, t: (n, 0, 0, 0)),
                # Blended weights / bias: constant index -> fetched once.
                pl.BlockSpec((Cout, kdim), lambda n, t: (0, 0)),
                pl.BlockSpec((Cout, 1), lambda n, t: (0, 0)),
            ],
            out_specs=pl.BlockSpec((1, Cout, tm), lambda n, t: (n, 0, t)),
        ),
        compiler_params=pltpu.CompilerParams(
            dimension_semantics=("parallel", "parallel"),
            vmem_limit_bytes=vmem_limit),
        cost_estimate=pl.CostEstimate(
            flops=2 * N * H * W * kdim * Cout,
            transcendentals=0,
            bytes_accessed=in_bytes + out_bytes),
    )(x_pad, w_t, b_col)

    # (N, Cout, H*W) -> (N, Cout, H, W): pure reshape, no transpose pass.
    return out_flat.reshape(N, Cout, H, W)


def _reference(x_nchw, w1, b1, w2, b2, r):
    """Pure-JAX f32 reference matching PyTorch Conv2d(k=3, pad=1) + lerp."""
    def conv(x, w_hwio, b):
        w_oihw = jnp.transpose(w_hwio, (3, 2, 0, 1))
        y = jax.lax.conv_general_dilated(
            x, w_oihw, window_strides=(1, 1), padding="SAME",
            dimension_numbers=("NCHW", "OIHW", "NCHW"))
        return y + b.reshape(1, -1, 1, 1)
    x1 = conv(x_nchw, w1, b1)
    x2 = conv(x_nchw, w2, b2)
    return x1 * (1.0 - r) + x2 * r


if __name__ == "__main__":
    key = jax.random.PRNGKey(0)
    kx, kw1, kb1, kw2, kb2 = jax.random.split(key, 5)

    N, Cin, H, W = 2, 4, 16, 16
    Cout, K = 8, 3
    r = 0.3  # TwinConv.r is assigned externally before forward; fixed here.

    x = jax.random.normal(kx, (N, Cin, H, W), jnp.float32)
    w1 = jax.random.normal(kw1, (K, K, Cin, Cout), jnp.float32) * 0.1
    b1 = jax.random.normal(kb1, (Cout,), jnp.float32) * 0.1
    w2 = jax.random.normal(kw2, (K, K, Cin, Cout), jnp.float32) * 0.1
    b2 = jax.random.normal(kb2, (Cout,), jnp.float32) * 0.1

    out = jax.block_until_ready(twin_conv(x, w1, b1, w2, b2, r))
    ref = jax.block_until_ready(_reference(x, w1, b1, w2, b2, r))

    assert out.shape == (N, Cout, H, W), out.shape
    err = float(jnp.max(jnp.abs(out - ref)))
    # bf16 activations/weights with f32 accumulation vs f32 reference.
    assert err < 5e-2, err

    print("KERNEL_OK")
</pallas_src>

<mosaic_0001>
module attributes {stable_mosaic.version = 11 : i64} {
  func.func @_twinconv_kernel(%arg0: i32, %arg1: i32, %arg2: memref<1x18x18x4xbf16, #tpu.memory_space<vmem>>, %arg3: memref<8x36xbf16, #tpu.memory_space<vmem>>, %arg4: memref<8x1xf32, #tpu.memory_space<vmem>>, %arg5: memref<1x8x256xf32, #tpu.memory_space<vmem>>) attributes {dimension_semantics = [#tpu.dimension_semantics<parallel>, #tpu.dimension_semantics<parallel>], iteration_bounds = array<i64: 2, 1>, scalar_prefetch = 0 : i64, scratch_operands = 0 : i64, tpu.core_type = #tpu.core_type<tc>, window_params = [{transform_indices = @transform_0, window_bounds = array<i64: 1, 18, 18, 4>}, {pipeline_mode = #tpu.pipeline_mode<synchronous>, transform_indices = @transform_1, window_bounds = array<i64: 8, 36>}, {pipeline_mode = #tpu.pipeline_mode<synchronous>, transform_indices = @transform_2, window_bounds = array<i64: 8, 1>}, {transform_indices = @transform_3, window_bounds = array<i64: 1, 8, 256>}]} {
    %c16_i32 = arith.constant 16 : i32
    %0 = arith.muli %arg1, %c16_i32 : i32
    %1 = tpu.assume_multiple %0, 16 : i32
    %c0_i32 = arith.constant 0 : i32
    %2 = arith.addi %1, %c0_i32 : i32
    %c0 = arith.constant 0 : index
    %3 = arith.index_cast %2 : i32 to index
    %c0_0 = arith.constant 0 : index
    %c0_1 = arith.constant 0 : index
    %4 = vector.load %arg2[%c0, %3, %c0_0, %c0_1] : memref<1x18x18x4xbf16, #tpu.memory_space<vmem>>, vector<1x16x16x4xbf16>
    %5 = vector.shape_cast %4 : vector<1x16x16x4xbf16> to vector<16x16x4xbf16>
    %6 = vector.shape_cast %5 : vector<16x16x4xbf16> to vector<256x4xbf16>
    %c0_i32_2 = arith.constant 0 : i32
    %7 = arith.addi %1, %c0_i32_2 : i32
    %c0_3 = arith.constant 0 : index
    %8 = arith.index_cast %7 : i32 to index
    %c1 = arith.constant 1 : index
    %c0_4 = arith.constant 0 : index
    %9 = vector.load %arg2[%c0_3, %8, %c1, %c0_4] : memref<1x18x18x4xbf16, #tpu.memory_space<vmem>>, vector<1x16x16x4xbf16>
    %10 = vector.shape_cast %9 : vector<1x16x16x4xbf16> to vector<16x16x4xbf16>
    %11 = vector.shape_cast %10 : vector<16x16x4xbf16> to vector<256x4xbf16>
    %c0_i32_5 = arith.constant 0 : i32
    %12 = arith.addi %1, %c0_i32_5 : i32
    %c0_6 = arith.constant 0 : index
    %13 = arith.index_cast %12 : i32 to index
    %c2 = arith.constant 2 : index
    %c0_7 = arith.constant 0 : index
    %14 = vector.load %arg2[%c0_6, %13, %c2, %c0_7] : memref<1x18x18x4xbf16, #tpu.memory_space<vmem>>, vector<1x16x16x4xbf16>
    %15 = vector.shape_cast %14 : vector<1x16x16x4xbf16> to vector<16x16x4xbf16>
    %16 = vector.shape_cast %15 : vector<16x16x4xbf16> to vector<256x4xbf16>
    %c1_i32 = arith.constant 1 : i32
    %17 = arith.addi %1, %c1_i32 : i32
    %c0_8 = arith.constant 0 : index
    %18 = arith.index_cast %17 : i32 to index
    %c0_9 = arith.constant 0 : index
    %c0_10 = arith.constant 0 : index
    %19 = vector.load %arg2[%c0_8, %18, %c0_9, %c0_10] : memref<1x18x18x4xbf16, #tpu.memory_space<vmem>>, vector<1x16x16x4xbf16>
    %20 = vector.shape_cast %19 : vector<1x16x16x4xbf16> to vector<16x16x4xbf16>
    %21 = vector.shape_cast %20 : vector<16x16x4xbf16> to vector<256x4xbf16>
    %c1_i32_11 = arith.constant 1 : i32
    %22 = arith.addi %1, %c1_i32_11 : i32
    %c0_12 = arith.constant 0 : index
    %23 = arith.index_cast %22 : i32 to index
    %c1_13 = arith.constant 1 : index
    %c0_14 = arith.constant 0 : index
    %24 = vector.load %arg2[%c0_12, %23, %c1_13, %c0_14] : memref<1x18x18x4xbf16, #tpu.memory_space<vmem>>, vector<1x16x16x4xbf16>
    %25 = vector.shape_cast %24 : vector<1x16x16x4xbf16> to vector<16x16x4xbf16>
    %26 = vector.shape_cast %25 : vector<16x16x4xbf16> to vector<256x4xbf16>
    %c1_i32_15 = arith.constant 1 : i32
    %27 = arith.addi %1, %c1_i32_15 : i32
    %c0_16 = arith.constant 0 : index
    %28 = arith.index_cast %27 : i32 to index
    %c2_17 = arith.constant 2 : index
    %c0_18 = arith.constant 0 : index
    %29 = vector.load %arg2[%c0_16, %28, %c2_17, %c0_18] : memref<1x18x18x4xbf16, #tpu.memory_space<vmem>>, vector<1x16x16x4xbf16>
    %30 = vector.shape_cast %29 : vector<1x16x16x4xbf16> to vector<16x16x4xbf16>
    %31 = vector.shape_cast %30 : vector<16x16x4xbf16> to vector<256x4xbf16>
    %c2_i32 = arith.constant 2 : i32
    %32 = arith.addi %1, %c2_i32 : i32
    %c0_19 = arith.constant 0 : index
    %33 = arith.index_cast %32 : i32 to index
    %c0_20 = arith.constant 0 : index
    %c0_21 = arith.constant 0 : index
    %34 = vector.load %arg2[%c0_19, %33, %c0_20, %c0_21] : memref<1x18x18x4xbf16, #tpu.memory_space<vmem>>, vector<1x16x16x4xbf16>
    %35 = vector.shape_cast %34 : vector<1x16x16x4xbf16> to vector<16x16x4xbf16>
    %36 = vector.shape_cast %35 : vector<16x16x4xbf16> to vector<256x4xbf16>
    %c2_i32_22 = arith.constant 2 : i32
    %37 = arith.addi %1, %c2_i32_22 : i32
    %c0_23 = arith.constant 0 : index
    %38 = arith.index_cast %37 : i32 to index
    %c1_24 = arith.constant 1 : index
    %c0_25 = arith.constant 0 : index
    %39 = vector.load %arg2[%c0_23, %38, %c1_24, %c0_25] : memref<1x18x18x4xbf16, #tpu.memory_space<vmem>>, vector<1x16x16x4xbf16>
    %40 = vector.shape_cast %39 : vector<1x16x16x4xbf16> to vector<16x16x4xbf16>
    %41 = vector.shape_cast %40 : vector<16x16x4xbf16> to vector<256x4xbf16>
    %c2_i32_26 = arith.constant 2 : i32
    %42 = arith.addi %1, %c2_i32_26 : i32
    %c0_27 = arith.constant 0 : index
    %43 = arith.index_cast %42 : i32 to index
    %c2_28 = arith.constant 2 : index
    %c0_29 = arith.constant 0 : index
    %44 = vector.load %arg2[%c0_27, %43, %c2_28, %c0_29] : memref<1x18x18x4xbf16, #tpu.memory_space<vmem>>, vector<1x16x16x4xbf16>
    %45 = vector.shape_cast %44 : vector<1x16x16x4xbf16> to vector<16x16x4xbf16>
    %46 = vector.shape_cast %45 : vector<16x16x4xbf16> to vector<256x4xbf16>
    %47 = tpu.concatenate %6, %11, %16, %21, %26, %31, %36, %41, %46 in 1 : vector<256x4xbf16>, vector<256x4xbf16>, vector<256x4xbf16>, vector<256x4xbf16>, vector<256x4xbf16>, vector<256x4xbf16>, vector<256x4xbf16>, vector<256x4xbf16>, vector<256x4xbf16> -> vector<256x36xbf16>
    %c0_30 = arith.constant 0 : index
    %c0_31 = arith.constant 0 : index
    %48 = vector.load %arg3[%c0_30, %c0_31] : memref<8x36xbf16, #tpu.memory_space<vmem>>, vector<8x36xbf16>
    %cst = arith.constant dense<0.000000e+00> : vector<8x256xf32>
    %49 = tpu.matmul %48, %47, %cst {dimension_numbers = #tpu.dot_dimension_numbers<[1], [1], [0], [0], [0, 0, 1, 0], [], []>} : vector<8x36xbf16>, vector<256x36xbf16>, vector<8x256xf32> -> vector<8x256xf32>
    %c0_32 = arith.constant 0 : index
    %c0_33 = arith.constant 0 : index
    %50 = vector.load %arg4[%c0_32, %c0_33] : memref<8x1xf32, #tpu.memory_space<vmem>>, vector<8x1xf32>
    %51 = vector.broadcast %50 : vector<8x1xf32> to vector<8x256xf32>
    %52 = arith.addf %49, %51 : vector<8x256xf32>
    %c0_34 = arith.constant 0 : index
    %c0_35 = arith.constant 0 : index
    %c0_36 = arith.constant 0 : index
    %53 = vector.load %arg5[%c0_34, %c0_35, %c0_36] : memref<1x8x256xf32, #tpu.memory_space<vmem>>, vector<1x8x256xf32>
    %54 = vector.shape_cast %53 : vector<1x8x256xf32> to vector<8x256xf32>
    %55 = vector.shape_cast %52 : vector<8x256xf32> to vector<1x8x256xf32>
    tpu.vector_store %arg5[%c0_34, %c0_35, %c0_36], %55 {strides = array<i32>} : memref<1x8x256xf32, #tpu.memory_space<vmem>>, vector<1x8x256xf32>,
    return
  }
  func.func @transform_0(%arg0: i32, %arg1: i32) -> (i32, i32, i32, i32) {
    %c0_i32 = arith.constant 0 : i32
    %c0_i32_0 = arith.constant 0 : i32
    %c0_i32_1 = arith.constant 0 : i32
    %c0_i32_2 = arith.constant 0 : i32
    return %arg0, %c0_i32, %c0_i32_0, %c0_i32_1 : i32, i32, i32, i32
  }
  func.func @transform_1(%arg0: i32, %arg1: i32) -> (i32, i32) {
    %c0_i32 = arith.constant 0 : i32
    %c0_i32_0 = arith.constant 0 : i32
    %c0_i32_1 = arith.constant 0 : i32
    return %c0_i32, %c0_i32_0 : i32, i32
  }
  func.func @transform_2(%arg0: i32, %arg1: i32) -> (i32, i32) {
    %c0_i32 = arith.constant 0 : i32
    %c0_i32_0 = arith.constant 0 : i32
    %c0_i32_1 = arith.constant 0 : i32
    return %c0_i32, %c0_i32_0 : i32, i32
  }
  func.func @transform_3(%arg0: i32, %arg1: i32) -> (i32, i32, i32) {
    %c0_i32 = arith.constant 0 : i32
    %c0_i32_0 = arith.constant 0 : i32
    return %arg0, %c0_i32, %arg1 : i32, i32, i32
  }
}

</mosaic_0001>

<llo_original>
// kernel: tpu_custom_call.1
$region0: #{tpu_custom_call.1}
  #allocation0 [shape = 'u32[]', space=smem, size = 0x4, offset = 0x4, fixed_abs, tag = 'smem constant byte address 0x4 - core index']
  #allocation1 [shape = 'u32[144,128]{1,0:T(1,128)}', space=vmem, size = 0x12000, scoped, tag = 'internal scratch']
  %s0 = inlined_call_operand.vmem [shape: bf16[2,18,18,4], index: 0, kind: input, shape index: {}]
  %s1 = inlined_call_operand.vmem [shape: bf16[8,36], index: 1, kind: input, shape index: {}]
  %s2 = inlined_call_operand.vmem [shape: f32[8,1], index: 2, kind: input, shape index: {}]
  %s3 = inlined_call_operand.hbm [shape: f32[2,8,256], index: 3, kind: output, shape index: {}]
  %s4 = sld [smem:[#allocation0]]
  $region45: #{tpu_custom_call.1} parent=0
    _
  %s6 = ssub.s32 1, %s4
  %s7 = scalar_select 0, %s6, %s4
  $region1: #{tpu_custom_call.1} parent=0
    #allocation2 [shape = 'u8[16384]{0}', space=vmem, size = 0x4000, scoped, tag = 'output window, operand 0']
    #allocation3 [shape = 's32[2]{0}', space=sflag, size = 0x8, scoped, tag = 'scoped memory for tpu_custom_call.1']
    %8 = vsyncpa [#allocation3], 0
    %s9 = scalar_lea.sflag [#allocation3], 1
    %10 = vsyncpa %s9, 0
    loop: start=0, step=1, limit=4
    $region2: #{tpu_custom_call.1} parent=1 // loop_pre_header
      _
    $region3: #{tpu_custom_call.1} parent=1 // loop_header
      %s12 = sphi 0, %s16
      %p13 = scmp.ge.s32.totalorder %s12, 4
      %s19 = sphi 0, %s31
      %s20 = sphi 0, %s27
      %s21 = sphi 0, %s19
      %s22 = sphi 0, %s20
      %s23 = sphi 0, %s21
      %s24 = sphi 0, %s22
      %s34 = sphi 0, %s36
      %s37 = sphi 0, %s34
      %s38 = sphi 0, %s37
      %s54 = sphi 0, %s38
      %s58 = sphi 0, %s58
      %s60 = sphi 0, %s58
      %s61 = sphi 0, %s60
      %s75 = sphi 0, %s61
      %s79 = sphi 0, %s79
      %s81 = sphi 0, %s79
      %s82 = sphi 0, %s81
      %s96 = sphi 0, %s82
      %s104 = sphi 0, %s106
      %s107 = sphi 0, %s104
      %s108 = sphi 0, %s107
      %s124 = sphi 0, %s108
    $region4: #{tpu_custom_call.1} parent=1 // loop_header_branch
      %15 = sbr.rel (%p13) target = $region8
    $region5: #{tpu_custom_call.1} parent=1 // loop_body
      %s17 = ssub.s32 %s12, 1
      %s18 = ssub.s32 %s12, 2
      %s25 = sadd.s32 1, %s20
      %p26 = scmp.ge.s32.totalorder %s25, 1
      %s27 = scalar_select %p26, 0, %s25
      %s28 = sadd.s32 1, %s19
      %s29 = scalar_select %p26, %s28, %s19
      %p30 = scmp.ge.s32.totalorder %s29, 2
      %s31 = scalar_select %p30, 0, %s29
      %s32 = ssub.s32 %s19, %s31
      %p33 = scmp.eq.s32.totalorder %s32, 0
      %s35 = sadd.s32 %s34, 1
      %s36 = scalar_select %p33, %s34, %s35
      %p39 = pneg %p33
      %p40 = scmp.eq.s32.totalorder %s12, 1
      %p41 = por %p39, %p40
      %p42 = scmp.ne.s32.totalorder %s34, %s37
      %p43 = scmp.eq.s32.totalorder %s12, 0
      %p44 = por %p42, %p43
      %p45 = scmp.ne.s32.totalorder %s34, %s37
      %p46 = scmp.eq.s32.totalorder %s17, 1
      %p47 = por %p45, %p46
      %p48 = scmp.ne.s32.totalorder %s37, %s38
      %p49 = scmp.eq.s32.totalorder %s17, 0
      %p50 = por %p48, %p49
      %p51 = scmp.ne.s32.totalorder %s37, %s38
      %p52 = scmp.eq.s32.totalorder %s18, 1
      %p53 = por %p51, %p52
      %p55 = scmp.ne.s32.totalorder %s38, %s54
      %p56 = scmp.eq.s32.totalorder %s18, 0
      %p57 = por %p55, %p56
      %s59 = sadd.s32 %s58, 1
      %p62 = scmp.eq.s32.totalorder %s12, 1
      %p63 = scmp.ne.s32.totalorder %s58, %s60
      %p64 = scmp.eq.s32.totalorder %s12, 0
      %p65 = por %p63, %p64
      %p66 = scmp.ne.s32.totalorder %s58, %s60
      %p67 = scmp.eq.s32.totalorder %s17, 1
      %p68 = por %p66, %p67
      %p69 = scmp.ne.s32.totalorder %s60, %s61
      %p70 = scmp.eq.s32.totalorder %s17, 0
      %p71 = por %p69, %p70
      %p72 = scmp.ne.s32.totalorder %s60, %s61
      %p73 = scmp.eq.s32.totalorder %s18, 1
      %p74 = por %p72, %p73
      %p76 = scmp.ne.s32.totalorder %s61, %s75
      %p77 = scmp.eq.s32.totalorder %s18, 0
      %p78 = por %p76, %p77
      %s80 = sadd.s32 %s79, 1
      %p83 = scmp.eq.s32.totalorder %s12, 1
      %p84 = scmp.ne.s32.totalorder %s79, %s81
      %p85 = scmp.eq.s32.totalorder %s12, 0
      %p86 = por %p84, %p85
      %p87 = scmp.ne.s32.totalorder %s79, %s81
      %p88 = scmp.eq.s32.totalorder %s17, 1
      %p89 = por %p87, %p88
      %p90 = scmp.ne.s32.totalorder %s81, %s82
      %p91 = scmp.eq.s32.totalorder %s17, 0
      %p92 = por %p90, %p91
      %p93 = scmp.ne.s32.totalorder %s81, %s82
      %p94 = scmp.eq.s32.totalorder %s18, 1
      %p95 = por %p93, %p94
      %p97 = scmp.ne.s32.totalorder %s82, %s96
      %p98 = scmp.eq.s32.totalorder %s18, 0
      %p99 = por %p97, %p98
      %s100 = ssub.s32 %s19, %s31
      %s101 = ssub.s32 %s20, %s27
      %s102 = sor.u32 %s100, %s101
      %p103 = scmp.eq.s32.totalorder %s102, 0
      %s105 = sadd.s32 %s104, 1
      %s106 = scalar_select %p103, %s104, %s105
      %p109 = pneg %p103
      %p110 = scmp.eq.s32.totalorder %s12, 1
      %p111 = por %p109, %p110
      %p112 = scmp.ne.s32.totalorder %s104, %s107
      %p113 = scmp.eq.s32.totalorder %s12, 0
      %p114 = por %p112, %p113
      %p115 = scmp.ne.s32.totalorder %s104, %s107
      %p116 = scmp.eq.s32.totalorder %s17, 1
      %p117 = por %p115, %p116
      %p118 = scmp.ne.s32.totalorder %s107, %s108
      %p119 = scmp.eq.s32.totalorder %s17, 0
      %p120 = por %p118, %p119
      %p121 = scmp.ne.s32.totalorder %s107, %s108
      %p122 = scmp.eq.s32.totalorder %s18, 1
      %p123 = por %p121, %p122
      %p125 = scmp.ne.s32.totalorder %s108, %s124
      %p126 = scmp.eq.s32.totalorder %s18, 0
      %p127 = por %p125, %p126
      %p128 = scmp.le.s32.totalorder 1, %s12
      %p129 = scmp.lt.s32.totalorder %s12, 3
      %p130 = pnand %p128, %p129
      %p131 = pneg %p130
      // Predicated region
      $region9: #{tpu_custom_call.1} parent=5 // pred_check
        _
      $region10: #{tpu_custom_call.1} parent=5 // pred_check_branch
        %133 = sbr.rel (%p130) target = $region12
      $region11: #{tpu_custom_call.1} parent=5 // pred_region
        %s134 = ssub.s32 %s12, 1
        // Predicated region
        $region13: #{tpu_custom_call.1} parent=11 // pred_check
          %p135 = pneg %p71
        $region14: #{tpu_custom_call.1} parent=11 // pred_check_branch
          %137 = sbr.rel (%p135) target = $region16
        $region15: #{tpu_custom_call.1} parent=11 // pred_region
          _
        $region16: #{tpu_custom_call.1} parent=11 // pred_fallthru
          _
        // Predicated region
        $region17: #{tpu_custom_call.1} parent=11 // pred_check
          %p138 = pneg %p92
        $region18: #{tpu_custom_call.1} parent=11 // pred_check_branch
          %140 = sbr.rel (%p138) target = $region20
        $region19: #{tpu_custom_call.1} parent=11 // pred_region
          _
        $region20: #{tpu_custom_call.1} parent=11 // pred_fallthru
          _
      $region12: #{tpu_custom_call.1} parent=5 // pred_fallthru
        _
      %p141 = scmp.lt.s32.totalorder %s12, 2
      // Predicated region
      $region21: #{tpu_custom_call.1} parent=5 // pred_check
        %p142 = pneg %p141
      $region22: #{tpu_custom_call.1} parent=5 // pred_check_branch
        %144 = sbr.rel (%p142) target = $region24
      $region23: #{tpu_custom_call.1} parent=5 // pred_region
        // Predicated region
        $region25: #{tpu_custom_call.1} parent=23 // pred_check
          %p145 = pneg %p44
        $region26: #{tpu_custom_call.1} parent=23 // pred_check_branch
          %147 = sbr.rel (%p145) target = $region28
        $region27: #{tpu_custom_call.1} parent=23 // pred_region
          %p148 = scmp.lt.s32.totalorder %s19, 1
          %s149 = scalar_select %p148, %s19, 1
          %s150 = smul.addr %s149, 54
          %s151 = smul.addr %s150, 4
          %s152 = scalar_lea.vmem %s0, %s151
        $region28: #{tpu_custom_call.1} parent=23 // pred_fallthru
          _
      $region24: #{tpu_custom_call.1} parent=5 // pred_fallthru
        _
      %p153 = scmp.le.s32.totalorder 1, %s12
      %p154 = scmp.lt.s32.totalorder %s12, 3
      %p155 = pnand %p153, %p154
      %p156 = pneg %p155
      // Predicated region
      $region29: #{tpu_custom_call.1} parent=5 // pred_check
        _
      $region30: #{tpu_custom_call.1} parent=5 // pred_check_branch
        %158 = sbr.rel (%p155) target = $region32
      $region31: #{tpu_custom_call.1} parent=5 // pred_region
        %s159 = ssub.s32 %s12, 1
        %p160 = scmp.lt.s32.totalorder %s21, 1
        %s161 = scalar_select %p160, %s21, 1
        %s162 = smul.addr %s161, 54
        %s163 = smul.addr %s162, 4
        %s164 = scalar_lea.vmem %s0, %s163
        %p165 = pneg %p50
        %p166 = pneg %p47
        %p167 = pneg %p71
        %p168 = pneg %p68
        %p169 = pneg %p92
        %p170 = pneg %p89
        %p171 = pneg %p120
        %p172 = pneg %p117
        %s173 = sand.u32 %s107, 1
        %s174 = scalar_lea.sflag [#allocation3], %s173
        %s175 = sand.u32 %s107, 1
        %s176 = smul.addr %s175, 16
        %s177 = scalar_lea.vmem [#allocation2], %s176
        %p178 = scmp.lt.s32.totalorder %s21, 1
        %s179 = scalar_select %p178, %s21, 1
        %s180 = smul.addr %s179, 54
        %s181 = smul.addr %s180, 4
        %s182 = scalar_lea.vmem %s0, %s181
        %s183 = smul.u32 2, %s22
        %s185 = smul.u32 %s22, 16
        %s186 = smul.u32 %s185, 3
        %s187 = smul.addr %s186, 4
        %s188 = scalar_lea.vmem %s182, %s187
        %v189 = vld [vmem:[%s188] sm:$0xf]
        %v190 = vld [vmem:[%s188 + $0x4] sm:$0xf]
        %v191 = vld [vmem:[%s188 + $0xc] sm:$0xf]
        %v192 = vld [vmem:[%s188 + $0x10] sm:$0xf]
        %v193 = vld [vmem:[%s188 + $0x18] sm:$0xf]
        %v194 = vld [vmem:[%s188 + $0x1c] sm:$0xf]
        %v195 = vld [vmem:[%s188 + $0x24] sm:$0xf]
        %v196 = vld [vmem:[%s188 + $0x28] sm:$0xf]
        %v197 = vld [vmem:[%s188 + $0x30] sm:$0xf]
        %v198 = vld [vmem:[%s188 + $0x34] sm:$0xf]
        %v199 = vld [vmem:[%s188 + $0x3c] sm:$0xf]
        %v200 = vld [vmem:[%s188 + $0x40] sm:$0xf]
        %v201 = vld [vmem:[%s188 + $0x48] sm:$0xf]
        %v202 = vld [vmem:[%s188 + $0x4c] sm:$0xf]
        %v203 = vld [vmem:[%s188 + $0x54] sm:$0xf]
        %v204 = vld [vmem:[%s188 + $0x58] sm:$0xf]
        %v205 = vld [vmem:[%s188 + $0x60] sm:$0xf]
        %v206 = vld [vmem:[%s188 + $0x64] sm:$0xf]
        %v207 = vld [vmem:[%s188 + $0x6c] sm:$0xf]
        %v208 = vld [vmem:[%s188 + $0x70] sm:$0xf]
        %v209 = vld [vmem:[%s188 + $0x78] sm:$0xf]
        %v210 = vld [vmem:[%s188 + $0x7c] sm:$0xf]
        %v211 = vld [vmem:[%s188 + $0x84] sm:$0xf]
        %v212 = vld [vmem:[%s188 + $0x88] sm:$0xf]
        %v213 = vld [vmem:[%s188 + $0x90] sm:$0xf]
        %v214 = vld [vmem:[%s188 + $0x94] sm:$0xf]
        %v215 = vld [vmem:[%s188 + $0x9c] sm:$0xf]
        %v216 = vld [vmem:[%s188 + $0xa0] sm:$0xf]
        %v217 = vld [vmem:[%s188 + $0xa8] sm:$0xf]
        %v218 = vld [vmem:[%s188 + $0xac] sm:$0xf]
        %v219 = vld [vmem:[%s188 + $0xb4] sm:$0xf]
        %v220 = vld [vmem:[%s188 + $0xb8] sm:$0xf]
        %v221 = vld [vmem:[%s188 + $0x8] sm:$0x1]
        %v222 = vld [vmem:[%s188 + $0x14] sm:$0x1]
        %v223 = vld [vmem:[%s188 + $0x20] sm:$0x1]
        %v224 = vld [vmem:[%s188 + $0x2c] sm:$0x1]
        %v225 = vld [vmem:[%s188 + $0x38] sm:$0x1]
        %v226 = vld [vmem:[%s188 + $0x44] sm:$0x1]
        %v227 = vld [vmem:[%s188 + $0x50] sm:$0x1]
        %v228 = vld [vmem:[%s188 + $0x5c] sm:$0x1]
        %v229 = vld [vmem:[%s188 + $0x68] sm:$0x1]
        %v230 = vld [vmem:[%s188 + $0x74] sm:$0x1]
        %v231 = vld [vmem:[%s188 + $0x80] sm:$0x1]
        %v232 = vld [vmem:[%s188 + $0x8c] sm:$0x1]
        %v233 = vld [vmem:[%s188 + $0x98] sm:$0x1]
        %v234 = vld [vmem:[%s188 + $0xa4] sm:$0x1]
        %v235 = vld [vmem:[%s188 + $0xb0] sm:$0x1]
        %v236 = vld [vmem:[%s188 + $0xbc] sm:$0x1]
        %vm237 = vsmask.f32 3328
        %vm238 = vsmask.f32 7440
        %vm239 = vmor %vm237, %vm238
        %v241 = vshrl.u32 %v189, 16
        %v243 = vrot.slane %v241, 4
        %v244 = vshll.u32 %v189, 16
        %v246 = vrot.slane %v244, 5
        %v247 = vor.u32 %v243, %v246
        %v248 = vrot.slane %v247, 4
        %v250 = vshll.u32 %v190, 16
        %v252 = vrot.slane %v250, 5
        %v253 = vsel %vm239, %v248, %v252
        %v254 = vshrl.u32 %v190, 16
        %v256 = vrot.slane %v254, 4
        %v257 = vor.u32 %v256, %v252
        %v258 = vrot.slane %v257, 4
        %v260 = vshll.u32 %v221, 16
        %v262 = vrot.slane %v260, 5
        %v263 = vsel %vm239, %v258, %v262
        %v265 = vshrl.u32 %v191, 16
        %v267 = vrot.slane %v265, 4
        %v268 = vshll.u32 %v191, 16
        %v270 = vrot.slane %v268, 5
        %v271 = vor.u32 %v267, %v270
        %v272 = vrot.slane %v271, 4
        %v274 = vshll.u32 %v192, 16
        %v276 = vrot.slane %v274, 5
        %v277 = vsel %vm239, %v272, %v276
        %v278 = vshrl.u32 %v192, 16
        %v280 = vrot.slane %v278, 4
        %v281 = vor.u32 %v280, %v276
        %v282 = vrot.slane %v281, 4
        %v284 = vshll.u32 %v222, 16
        %v286 = vrot.slane %v284, 5
        %v287 = vsel %vm239, %v282, %v286
        %v289 = vshrl.u32 %v193, 16
        %v291 = vrot.slane %v289, 4
        %v292 = vshll.u32 %v193, 16
        %v294 = vrot.slane %v292, 5
        %v295 = vor.u32 %v291, %v294
        %v296 = vrot.slane %v295, 4
        %v298 = vshll.u32 %v194, 16
        %v300 = vrot.slane %v298, 5
        %v301 = vsel %vm239, %v296, %v300
        %v302 = vshrl.u32 %v194, 16
        %v304 = vrot.slane %v302, 4
        %v305 = vor.u32 %v304, %v300
        %v306 = vrot.slane %v305, 4
        %v308 = vshll.u32 %v223, 16
        %v310 = vrot.slane %v308, 5
        %v311 = vsel %vm239, %v306, %v310
        %v313 = vshrl.u32 %v195, 16
        %v315 = vrot.slane %v313, 4
        %v316 = vshll.u32 %v195, 16
        %v318 = vrot.slane %v316, 5
        %v319 = vor.u32 %v315, %v318
        %v320 = vrot.slane %v319, 4
        %v322 = vshll.u32 %v196, 16
        %v324 = vrot.slane %v322, 5
        %v325 = vsel %vm239, %v320, %v324
        %v326 = vshrl.u32 %v196, 16
        %v328 = vrot.slane %v326, 4
        %v329 = vor.u32 %v328, %v324
        %v330 = vrot.slane %v329, 4
        %v332 = vshll.u32 %v224, 16
        %v334 = vrot.slane %v332, 5
        %v335 = vsel %vm239, %v330, %v334
        %v337 = vshrl.u32 %v197, 16
        %v339 = vrot.slane %v337, 4
        %v340 = vshll.u32 %v197, 16
        %v342 = vrot.slane %v340, 5
        %v343 = vor.u32 %v339, %v342
        %v344 = vrot.slane %v343, 4
        %v346 = vshll.u32 %v198, 16
        %v348 = vrot.slane %v346, 5
        %v349 = vsel %vm239, %v344, %v348
        %v350 = vshrl.u32 %v198, 16
        %v352 = vrot.slane %v350, 4
        %v353 = vor.u32 %v352, %v348
        %v354 = vrot.slane %v353, 4
        %v356 = vshll.u32 %v225, 16
        %v358 = vrot.slane %v356, 5
        %v359 = vsel %vm239, %v354, %v358
        %v361 = vshrl.u32 %v199, 16
        %v363 = vrot.slane %v361, 4
        %v364 = vshll.u32 %v199, 16
        %v366 = vrot.slane %v364, 5
        %v367 = vor.u32 %v363, %v366
        %v368 = vrot.slane %v367, 4
        %v370 = vshll.u32 %v200, 16
        %v372 = vrot.slane %v370, 5
        %v373 = vsel %vm239, %v368, %v372
        %v374 = vshrl.u32 %v200, 16
        %v376 = vrot.slane %v374, 4
        %v377 = vor.u32 %v376, %v372
        %v378 = vrot.slane %v377, 4
        %v380 = vshll.u32 %v226, 16
        %v382 = vrot.slane %v380, 5
        %v383 = vsel %vm239, %v378, %v382
        %v385 = vshrl.u32 %v201, 16
        %v387 = vrot.slane %v385, 4
        %v388 = vshll.u32 %v201, 16
        %v390 = vrot.slane %v388, 5
        %v391 = vor.u32 %v387, %v390
        %v392 = vrot.slane %v391, 4
        %v394 = vshll.u32 %v202, 16
        %v396 = vrot.slane %v394, 5
        %v397 = vsel %vm239, %v392, %v396
        %v398 = vshrl.u32 %v202, 16
        %v400 = vrot.slane %v398, 4
        %v401 = vor.u32 %v400, %v396
        %v402 = vrot.slane %v401, 4
        %v404 = vshll.u32 %v227, 16
        %v406 = vrot.slane %v404, 5
        %v407 = vsel %vm239, %v402, %v406
        %v409 = vshrl.u32 %v203, 16
        %v411 = vrot.slane %v409, 4
        %v412 = vshll.u32 %v203, 16
        %v414 = vrot.slane %v412, 5
        %v415 = vor.u32 %v411, %v414
        %v416 = vrot.slane %v415, 4
        %v418 = vshll.u32 %v204, 16
        %v420 = vrot.slane %v418, 5
        %v421 = vsel %vm239, %v416, %v420
        %v422 = vshrl.u32 %v204, 16
        %v424 = vrot.slane %v422, 4
        %v425 = vor.u32 %v424, %v420
        %v426 = vrot.slane %v425, 4
        %v428 = vshll.u32 %v228, 16
        %v430 = vrot.slane %v428, 5
        %v431 = vsel %vm239, %v426, %v430
        %v433 = vshrl.u32 %v205, 16
        %v435 = vrot.slane %v433, 4
        %v436 = vshll.u32 %v205, 16
        %v438 = vrot.slane %v436, 5
        %v439 = vor.u32 %v435, %v438
        %v440 = vrot.slane %v439, 4
        %v442 = vshll.u32 %v206, 16
        %v444 = vrot.slane %v442, 5
        %v445 = vsel %vm239, %v440, %v444
        %v446 = vshrl.u32 %v206, 16
        %v448 = vrot.slane %v446, 4
        %v449 = vor.u32 %v448, %v444
        %v450 = vrot.slane %v449, 4
        %v452 = vshll.u32 %v229, 16
        %v454 = vrot.slane %v452, 5
        %v455 = vsel %vm239, %v450, %v454
        %v457 = vshrl.u32 %v207, 16
        %v459 = vrot.slane %v457, 4
        %v460 = vshll.u32 %v207, 16
        %v462 = vrot.slane %v460, 5
        %v463 = vor.u32 %v459, %v462
        %v464 = vrot.slane %v463, 4
        %v466 = vshll.u32 %v208, 16
        %v468 = vrot.slane %v466, 5
        %v469 = vsel %vm239, %v464, %v468
        %v470 = vshrl.u32 %v208, 16
        %v472 = vrot.slane %v470, 4
        %v473 = vor.u32 %v472, %v468
        %v474 = vrot.slane %v473, 4
        %v476 = vshll.u32 %v230, 16
        %v478 = vrot.slane %v476, 5
        %v479 = vsel %vm239, %v474, %v478
        %v481 = vshrl.u32 %v209, 16
        %v483 = vrot.slane %v481, 4
        %v484 = vshll.u32 %v209, 16
        %v486 = vrot.slane %v484, 5
        %v487 = vor.u32 %v483, %v486
        %v488 = vrot.slane %v487, 4
        %v490 = vshll.u32 %v210, 16
        %v492 = vrot.slane %v490, 5
        %v493 = vsel %vm239, %v488, %v492
        %v494 = vshrl.u32 %v210, 16
        %v496 = vrot.slane %v494, 4
        %v497 = vor.u32 %v496, %v492
        %v498 = vrot.slane %v497, 4
        %v500 = vshll.u32 %v231, 16
        %v502 = vrot.slane %v500, 5
        %v503 = vsel %vm239, %v498, %v502
        %v505 = vshrl.u32 %v211, 16
        %v507 = vrot.slane %v505, 4
        %v508 = vshll.u32 %v211, 16
        %v510 = vrot.slane %v508, 5
        %v511 = vor.u32 %v507, %v510
        %v512 = vrot.slane %v511, 4
        %v514 = vshll.u32 %v212, 16
        %v516 = vrot.slane %v514, 5
        %v517 = vsel %vm239, %v512, %v516
        %v518 = vshrl.u32 %v212, 16
        %v520 = vrot.slane %v518, 4
        %v521 = vor.u32 %v520, %v516
        %v522 = vrot.slane %v521, 4
        %v524 = vshll.u32 %v232, 16
        %v526 = vrot.slane %v524, 5
        %v527 = vsel %vm239, %v522, %v526
        %v529 = vshrl.u32 %v213, 16
        %v531 = vrot.slane %v529, 4
        %v532 = vshll.u32 %v213, 16
        %v534 = vrot.slane %v532, 5
        %v535 = vor.u32 %v531, %v534
        %v536 = vrot.slane %v535, 4
        %v538 = vshll.u32 %v214, 16
        %v540 = vrot.slane %v538, 5
        %v541 = vsel %vm239, %v536, %v540
        %v542 = vshrl.u32 %v214, 16
        %v544 = vrot.slane %v542, 4
        %v545 = vor.u32 %v544, %v540
        %v546 = vrot.slane %v545, 4
        %v548 = vshll.u32 %v233, 16
        %v550 = vrot.slane %v548, 5
        %v551 = vsel %vm239, %v546, %v550
        %v553 = vshrl.u32 %v215, 16
        %v555 = vrot.slane %v553, 4
        %v556 = vshll.u32 %v215, 16
        %v558 = vrot.slane %v556, 5
        %v559 = vor.u32 %v555, %v558
        %v560 = vrot.slane %v559, 4
        %v562 = vshll.u32 %v216, 16
        %v564 = vrot.slane %v562, 5
        %v565 = vsel %vm239, %v560, %v564
        %v566 = vshrl.u32 %v216, 16
        %v568 = vrot.slane %v566, 4
        %v569 = vor.u32 %v568, %v564
        %v570 = vrot.slane %v569, 4
        %v572 = vshll.u32 %v234, 16
        %v574 = vrot.slane %v572, 5
        %v575 = vsel %vm239, %v570, %v574
        %v577 = vshrl.u32 %v217, 16
        %v579 = vrot.slane %v577, 4
        %v580 = vshll.u32 %v217, 16
        %v582 = vrot.slane %v580, 5
        %v583 = vor.u32 %v579, %v582
        %v584 = vrot.slane %v583, 4
        %v586 = vshll.u32 %v218, 16
        %v588 = vrot.slane %v586, 5
        %v589 = vsel %vm239, %v584, %v588
        %v590 = vshrl.u32 %v218, 16
        %v592 = vrot.slane %v590, 4
        %v593 = vor.u32 %v592, %v588
        %v594 = vrot.slane %v593, 4
        %v596 = vshll.u32 %v235, 16
        %v598 = vrot.slane %v596, 5
        %v599 = vsel %vm239, %v594, %v598
        %v601 = vshrl.u32 %v219, 16
        %v603 = vrot.slane %v601, 4
        %v604 = vshll.u32 %v219, 16
        %v606 = vrot.slane %v604, 5
        %v607 = vor.u32 %v603, %v606
        %v608 = vrot.slane %v607, 4
        %v610 = vshll.u32 %v220, 16
        %v612 = vrot.slane %v610, 5
        %v613 = vsel %vm239, %v608, %v612
        %v614 = vshrl.u32 %v220, 16
        %v616 = vrot.slane %v614, 4
        %v617 = vor.u32 %v616, %v612
        %v618 = vrot.slane %v617, 4
        %v620 = vshll.u32 %v236, 16
        %v622 = vrot.slane %v620, 5
        %v623 = vsel %vm239, %v618, %v622
        %v624 = vld [vmem:[%s188] sm:$0xe]
        %v625 = vld [vmem:[%s188 + $0xc] sm:$0xe]
        %v626 = vld [vmem:[%s188 + $0x18] sm:$0xe]
        %v627 = vld [vmem:[%s188 + $0x24] sm:$0xe]
        %v628 = vld [vmem:[%s188 + $0x30] sm:$0xe]
        %v629 = vld [vmem:[%s188 + $0x3c] sm:$0xe]
        %v630 = vld [vmem:[%s188 + $0x48] sm:$0xe]
        %v631 = vld [vmem:[%s188 + $0x54] sm:$0xe]
        %v632 = vld [vmem:[%s188 + $0x60] sm:$0xe]
        %v633 = vld [vmem:[%s188 + $0x6c] sm:$0xe]
        %v634 = vld [vmem:[%s188 + $0x78] sm:$0xe]
        %v635 = vld [vmem:[%s188 + $0x84] sm:$0xe]
        %v636 = vld [vmem:[%s188 + $0x90] sm:$0xe]
        %v637 = vld [vmem:[%s188 + $0x9c] sm:$0xe]
        %v638 = vld [vmem:[%s188 + $0xa8] sm:$0xe]
        %v639 = vld [vmem:[%s188 + $0xb4] sm:$0xe]
        %vm688 = vcmask 1042432
        %vm689 = vcmask 1046532
        %vm690 = vmor %vm688, %vm689
        %v691 = vrot.slane %v624, 5
        %v692 = vrot.slane %v691, 4
        %v693 = vrot.slane %v190, 5
        %v694 = vsel %vm690, %v692, %v693
        %v695 = vrot.slane %v693, 4
        %v696 = vrot.slane %v221, 5
        %v697 = vsel %vm690, %v695, %v696
        %v698 = vrot.slane %v625, 5
        %v699 = vrot.slane %v698, 4
        %v700 = vrot.slane %v192, 5
        %v701 = vsel %vm690, %v699, %v700
        %v702 = vrot.slane %v700, 4
        %v703 = vrot.slane %v222, 5
        %v704 = vsel %vm690, %v702, %v703
        %v705 = vrot.slane %v626, 5
        %v706 = vrot.slane %v705, 4
        %v707 = vrot.slane %v194, 5
        %v708 = vsel %vm690, %v706, %v707
        %v709 = vrot.slane %v707, 4
        %v710 = vrot.slane %v223, 5
        %v711 = vsel %vm690, %v709, %v710
        %v712 = vrot.slane %v627, 5
        %v713 = vrot.slane %v712, 4
        %v714 = vrot.slane %v196, 5
        %v715 = vsel %vm690, %v713, %v714
        %v716 = vrot.slane %v714, 4
        %v717 = vrot.slane %v224, 5
        %v718 = vsel %vm690, %v716, %v717
        %v719 = vrot.slane %v628, 5
        %v720 = vrot.slane %v719, 4
        %v721 = vrot.slane %v198, 5
        %v722 = vsel %vm690, %v720, %v721
        %v723 = vrot.slane %v721, 4
        %v724 = vrot.slane %v225, 5
        %v725 = vsel %vm690, %v723, %v724
        %v726 = vrot.slane %v629, 5
        %v727 = vrot.slane %v726, 4
        %v728 = vrot.slane %v200, 5
        %v729 = vsel %vm690, %v727, %v728
        %v730 = vrot.slane %v728, 4
        %v731 = vrot.slane %v226, 5
        %v732 = vsel %vm690, %v730, %v731
        %v733 = vrot.slane %v630, 5
        %v734 = vrot.slane %v733, 4
        %v735 = vrot.slane %v202, 5
        %v736 = vsel %vm690, %v734, %v735
        %v737 = vrot.slane %v735, 4
        %v738 = vrot.slane %v227, 5
        %v739 = vsel %vm690, %v737, %v738
        %v740 = vrot.slane %v631, 5
        %v741 = vrot.slane %v740, 4
        %v742 = vrot.slane %v204, 5
        %v743 = vsel %vm690, %v741, %v742
        %v744 = vrot.slane %v742, 4
        %v745 = vrot.slane %v228, 5
        %v746 = vsel %vm690, %v744, %v745
        %v747 = vrot.slane %v632, 5
        %v748 = vrot.slane %v747, 4
        %v749 = vrot.slane %v206, 5
        %v750 = vsel %vm690, %v748, %v749
        %v751 = vrot.slane %v749, 4
        %v752 = vrot.slane %v229, 5
        %v753 = vsel %vm690, %v751, %v752
        %v754 = vrot.slane %v633, 5
        %v755 = vrot.slane %v754, 4
        %v756 = vrot.slane %v208, 5
        %v757 = vsel %vm690, %v755, %v756
        %v758 = vrot.slane %v756, 4
        %v759 = vrot.slane %v230, 5
        %v760 = vsel %vm690, %v758, %v759
        %v761 = vrot.slane %v634, 5
        %v762 = vrot.slane %v761, 4
        %v763 = vrot.slane %v210, 5
        %v764 = vsel %vm690, %v762, %v763
        %v765 = vrot.slane %v763, 4
        %v766 = vrot.slane %v231, 5
        %v767 = vsel %vm690, %v765, %v766
        %v768 = vrot.slane %v635, 5
        %v769 = vrot.slane %v768, 4
        %v770 = vrot.slane %v212, 5
        %v771 = vsel %vm690, %v769, %v770
        %v772 = vrot.slane %v770, 4
        %v773 = vrot.slane %v232, 5
        %v774 = vsel %vm690, %v772, %v773
        %v775 = vrot.slane %v636, 5
        %v776 = vrot.slane %v775, 4
        %v777 = vrot.slane %v214, 5
        %v778 = vsel %vm690, %v776, %v777
        %v779 = vrot.slane %v777, 4
        %v780 = vrot.slane %v233, 5
        %v781 = vsel %vm690, %v779, %v780
        %v782 = vrot.slane %v637, 5
        %v783 = vrot.slane %v782, 4
        %v784 = vrot.slane %v216, 5
        %v785 = vsel %vm690, %v783, %v784
        %v786 = vrot.slane %v784, 4
        %v787 = vrot.slane %v234, 5
        %v788 = vsel %vm690, %v786, %v787
        %v789 = vrot.slane %v638, 5
        %v790 = vrot.slane %v789, 4
        %v791 = vrot.slane %v218, 5
        %v792 = vsel %vm690, %v790, %v791
        %v793 = vrot.slane %v791, 4
        %v794 = vrot.slane %v235, 5
        %v795 = vsel %vm690, %v793, %v794
        %v796 = vrot.slane %v639, 5
        %v797 = vrot.slane %v796, 4
        %v798 = vrot.slane %v220, 5
        %v799 = vsel %vm690, %v797, %v798
        %v800 = vrot.slane %v798, 4
        %v801 = vrot.slane %v236, 5
        %v802 = vsel %vm690, %v800, %v801
        %s803 = sadd.s32 %s185, 1
        %s804 = smul.u32 %s803, 3
        %s805 = smul.addr %s804, 4
        %s806 = scalar_lea.vmem %s182, %s805
        %v807 = vld [vmem:[%s806] sm:$0xf]
        %v808 = vld [vmem:[%s806 + $0x4] sm:$0xf]
        %v809 = vld [vmem:[%s806 + $0xc] sm:$0xf]
        %v810 = vld [vmem:[%s806 + $0x10] sm:$0xf]
        %v811 = vld [vmem:[%s806 + $0x18] sm:$0xf]
        %v812 = vld [vmem:[%s806 + $0x1c] sm:$0xf]
        %v813 = vld [vmem:[%s806 + $0x24] sm:$0xf]
        %v814 = vld [vmem:[%s806 + $0x28] sm:$0xf]
        %v815 = vld [vmem:[%s806 + $0x30] sm:$0xf]
        %v816 = vld [vmem:[%s806 + $0x34] sm:$0xf]
        %v817 = vld [vmem:[%s806 + $0x3c] sm:$0xf]
        %v818 = vld [vmem:[%s806 + $0x40] sm:$0xf]
        %v819 = vld [vmem:[%s806 + $0x48] sm:$0xf]
        %v820 = vld [vmem:[%s806 + $0x4c] sm:$0xf]
        %v821 = vld [vmem:[%s806 + $0x54] sm:$0xf]
        %v822 = vld [vmem:[%s806 + $0x58] sm:$0xf]
        %v823 = vld [vmem:[%s806 + $0x60] sm:$0xf]
        %v824 = vld [vmem:[%s806 + $0x64] sm:$0xf]
        %v825 = vld [vmem:[%s806 + $0x6c] sm:$0xf]
        %v826 = vld [vmem:[%s806 + $0x70] sm:$0xf]
        %v827 = vld [vmem:[%s806 + $0x78] sm:$0xf]
        %v828 = vld [vmem:[%s806 + $0x7c] sm:$0xf]
        %v829 = vld [vmem:[%s806 + $0x84] sm:$0xf]
        %v830 = vld [vmem:[%s806 + $0x88] sm:$0xf]
        %v831 = vld [vmem:[%s806 + $0x90] sm:$0xf]
        %v832 = vld [vmem:[%s806 + $0x94] sm:$0xf]
        %v833 = vld [vmem:[%s806 + $0x9c] sm:$0xf]
        %v834 = vld [vmem:[%s806 + $0xa0] sm:$0xf]
        %v835 = vld [vmem:[%s806 + $0xa8] sm:$0xf]
        %v836 = vld [vmem:[%s806 + $0xac] sm:$0xf]
        %v837 = vld [vmem:[%s806 + $0xb4] sm:$0xf]
        %v838 = vld [vmem:[%s806 + $0xb8] sm:$0xf]
        %v839 = vld [vmem:[%s806 + $0x8] sm:$0x1]
        %v840 = vld [vmem:[%s806 + $0x14] sm:$0x1]
        %v841 = vld [vmem:[%s806 + $0x20] sm:$0x1]
        %v842 = vld [vmem:[%s806 + $0x2c] sm:$0x1]
        %v843 = vld [vmem:[%s806 + $0x38] sm:$0x1]
        %v844 = vld [vmem:[%s806 + $0x44] sm:$0x1]
        %v845 = vld [vmem:[%s806 + $0x50] sm:$0x1]
        %v846 = vld [vmem:[%s806 + $0x5c] sm:$0x1]
        %v847 = vld [vmem:[%s806 + $0x68] sm:$0x1]
        %v848 = vld [vmem:[%s806 + $0x74] sm:$0x1]
        %v849 = vld [vmem:[%s806 + $0x80] sm:$0x1]
        %v850 = vld [vmem:[%s806 + $0x8c] sm:$0x1]
        %v851 = vld [vmem:[%s806 + $0x98] sm:$0x1]
        %v852 = vld [vmem:[%s806 + $0xa4] sm:$0x1]
        %v853 = vld [vmem:[%s806 + $0xb0] sm:$0x1]
        %v854 = vld [vmem:[%s806 + $0xbc] sm:$0x1]
        %v856 = vshrl.u32 %v807, 16
        %v858 = vrot.slane %v856, 4
        %v859 = vshll.u32 %v807, 16
        %v861 = vrot.slane %v859, 5
        %v862 = vor.u32 %v858, %v861
        %v863 = vrot.slane %v862, 4
        %v865 = vshll.u32 %v808, 16
        %v867 = vrot.slane %v865, 5
        %v868 = vsel %vm239, %v863, %v867
        %v869 = vshrl.u32 %v808, 16
        %v871 = vrot.slane %v869, 4
        %v872 = vor.u32 %v871, %v867
        %v873 = vrot.slane %v872, 4
        %v875 = vshll.u32 %v839, 16
        %v877 = vrot.slane %v875, 5
        %v878 = vsel %vm239, %v873, %v877
        %v880 = vshrl.u32 %v809, 16
        %v882 = vrot.slane %v880, 4
        %v883 = vshll.u32 %v809, 16
        %v885 = vrot.slane %v883, 5
        %v886 = vor.u32 %v882, %v885
        %v887 = vrot.slane %v886, 4
        %v889 = vshll.u32 %v810, 16
        %v891 = vrot.slane %v889, 5
        %v892 = vsel %vm239, %v887, %v891
        %v893 = vshrl.u32 %v810, 16
        %v895 = vrot.slane %v893, 4
        %v896 = vor.u32 %v895, %v891
        %v897 = vrot.slane %v896, 4
        %v899 = vshll.u32 %v840, 16
        %v901 = vrot.slane %v899, 5
        %v902 = vsel %vm239, %v897, %v901
        %v904 = vshrl.u32 %v811, 16
        %v906 = vrot.slane %v904, 4
        %v907 = vshll.u32 %v811, 16
        %v909 = vrot.slane %v907, 5
        %v910 = vor.u32 %v906, %v909
        %v911 = vrot.slane %v910, 4
        %v913 = vshll.u32 %v812, 16
        %v915 = vrot.slane %v913, 5
        %v916 = vsel %vm239, %v911, %v915
        %v917 = vshrl.u32 %v812, 16
        %v919 = vrot.slane %v917, 4
        %v920 = vor.u32 %v919, %v915
        %v921 = vrot.slane %v920, 4
        %v923 = vshll.u32 %v841, 16
        %v925 = vrot.slane %v923, 5
        %v926 = vsel %vm239, %v921, %v925
        %v928 = vshrl.u32 %v813, 16
        %v930 = vrot.slane %v928, 4
        %v931 = vshll.u32 %v813, 16
        %v933 = vrot.slane %v931, 5
        %v934 = vor.u32 %v930, %v933
        %v935 = vrot.slane %v934, 4
        %v937 = vshll.u32 %v814, 16
        %v939 = vrot.slane %v937, 5
        %v940 = vsel %vm239, %v935, %v939
        %v941 = vshrl.u32 %v814, 16
        %v943 = vrot.slane %v941, 4
        %v944 = vor.u32 %v943, %v939
        %v945 = vrot.slane %v944, 4
        %v947 = vshll.u32 %v842, 16
        %v949 = vrot.slane %v947, 5
        %v950 = vsel %vm239, %v945, %v949
        %v952 = vshrl.u32 %v815, 16
        %v954 = vrot.slane %v952, 4
        %v955 = vshll.u32 %v815, 16
        %v957 = vrot.slane %v955, 5
        %v958 = vor.u32 %v954, %v957
        %v959 = vrot.slane %v958, 4
        %v961 = vshll.u32 %v816, 16
        %v963 = vrot.slane %v961, 5
        %v964 = vsel %vm239, %v959, %v963
        %v965 = vshrl.u32 %v816, 16
        %v967 = vrot.slane %v965, 4
        %v968 = vor.u32 %v967, %v963
        %v969 = vrot.slane %v968, 4
        %v971 = vshll.u32 %v843, 16
        %v973 = vrot.slane %v971, 5
        %v974 = vsel %vm239, %v969, %v973
        %v976 = vshrl.u32 %v817, 16
        %v978 = vrot.slane %v976, 4
        %v979 = vshll.u32 %v817, 16
        %v981 = vrot.slane %v979, 5
        %v982 = vor.u32 %v978, %v981
        %v983 = vrot.slane %v982, 4
        %v985 = vshll.u32 %v818, 16
        %v987 = vrot.slane %v985, 5
        %v988 = vsel %vm239, %v983, %v987
        %v989 = vshrl.u32 %v818, 16
        %v991 = vrot.slane %v989, 4
        %v992 = vor.u32 %v991, %v987
        %v993 = vrot.slane %v992, 4
        %v995 = vshll.u32 %v844, 16
        %v997 = vrot.slane %v995, 5
        %v998 = vsel %vm239, %v993, %v997
        %v1000 = vshrl.u32 %v819, 16
        %v1002 = vrot.slane %v1000, 4
        %v1003 = vshll.u32 %v819, 16
        %v1005 = vrot.slane %v1003, 5
        %v1006 = vor.u32 %v1002, %v1005
        %v1007 = vrot.slane %v1006, 4
        %v1009 = vshll.u32 %v820, 16
        %v1011 = vrot.slane %v1009, 5
        %v1012 = vsel %vm239, %v1007, %v1011
        %v1013 = vshrl.u32 %v820, 16
        %v1015 = vrot.slane %v1013, 4
        %v1016 = vor.u32 %v1015, %v1011
        %v1017 = vrot.slane %v1016, 4
        %v1019 = vshll.u32 %v845, 16
        %v1021 = vrot.slane %v1019, 5
        %v1022 = vsel %vm239, %v1017, %v1021
        %v1024 = vshrl.u32 %v821, 16
        %v1026 = vrot.slane %v1024, 4
        %v1027 = vshll.u32 %v821, 16
        %v1029 = vrot.slane %v1027, 5
        %v1030 = vor.u32 %v1026, %v1029
        %v1031 = vrot.slane %v1030, 4
        %v1033 = vshll.u32 %v822, 16
        %v1035 = vrot.slane %v1033, 5
        %v1036 = vsel %vm239, %v1031, %v1035
        %v1037 = vshrl.u32 %v822, 16
        %v1039 = vrot.slane %v1037, 4
        %v1040 = vor.u32 %v1039, %v1035
        %v1041 = vrot.slane %v1040, 4
        %v1043 = vshll.u32 %v846, 16
        %v1045 = vrot.slane %v1043, 5
        %v1046 = vsel %vm239, %v1041, %v1045
        %v1048 = vshrl.u32 %v823, 16
        %v1050 = vrot.slane %v1048, 4
        %v1051 = vshll.u32 %v823, 16
        %v1053 = vrot.slane %v1051, 5
        %v1054 = vor.u32 %v1050, %v1053
        %v1055 = vrot.slane %v1054, 4
        %v1057 = vshll.u32 %v824, 16
        %v1059 = vrot.slane %v1057, 5
        %v1060 = vsel %vm239, %v1055, %v1059
        %v1061 = vshrl.u32 %v824, 16
        %v1063 = vrot.slane %v1061, 4
        %v1064 = vor.u32 %v1063, %v1059
        %v1065 = vrot.slane %v1064, 4
        %v1067 = vshll.u32 %v847, 16
        %v1069 = vrot.slane %v1067, 5
        %v1070 = vsel %vm239, %v1065, %v1069
        %v1072 = vshrl.u32 %v825, 16
        %v1074 = vrot.slane %v1072, 4
        %v1075 = vshll.u32 %v825, 16
        %v1077 = vrot.slane %v1075, 5
        %v1078 = vor.u32 %v1074, %v1077
        %v1079 = vrot.slane %v1078, 4
        %v1081 = vshll.u32 %v826, 16
        %v1083 = vrot.slane %v1081, 5
        %v1084 = vsel %vm239, %v1079, %v1083
        %v1085 = vshrl.u32 %v826, 16
        %v1087 = vrot.slane %v1085, 4
        %v1088 = vor.u32 %v1087, %v1083
        %v1089 = vrot.slane %v1088, 4
        %v1091 = vshll.u32 %v848, 16
        %v1093 = vrot.slane %v1091, 5
        %v1094 = vsel %vm239, %v1089, %v1093
        %v1096 = vshrl.u32 %v827, 16
        %v1098 = vrot.slane %v1096, 4
        %v1099 = vshll.u32 %v827, 16
        %v1101 = vrot.slane %v1099, 5
        %v1102 = vor.u32 %v1098, %v1101
        %v1103 = vrot.slane %v1102, 4
        %v1105 = vshll.u32 %v828, 16
        %v1107 = vrot.slane %v1105, 5
        %v1108 = vsel %vm239, %v1103, %v1107
        %v1109 = vshrl.u32 %v828, 16
        %v1111 = vrot.slane %v1109, 4
        %v1112 = vor.u32 %v1111, %v1107
        %v1113 = vrot.slane %v1112, 4
        %v1115 = vshll.u32 %v849, 16
        %v1117 = vrot.slane %v1115, 5
        %v1118 = vsel %vm239, %v1113, %v1117
        %v1120 = vshrl.u32 %v829, 16
        %v1122 = vrot.slane %v1120, 4
        %v1123 = vshll.u32 %v829, 16
        %v1125 = vrot.slane %v1123, 5
        %v1126 = vor.u32 %v1122, %v1125
        %v1127 = vrot.slane %v1126, 4
        %v1129 = vshll.u32 %v830, 16
        %v1131 = vrot.slane %v1129, 5
        %v1132 = vsel %vm239, %v1127, %v1131
        %v1133 = vshrl.u32 %v830, 16
        %v1135 = vrot.slane %v1133, 4
        %v1136 = vor.u32 %v1135, %v1131
        %v1137 = vrot.slane %v1136, 4
        %v1139 = vshll.u32 %v850, 16
        %v1141 = vrot.slane %v1139, 5
        %v1142 = vsel %vm239, %v1137, %v1141
        %v1144 = vshrl.u32 %v831, 16
        %v1146 = vrot.slane %v1144, 4
        %v1147 = vshll.u32 %v831, 16
        %v1149 = vrot.slane %v1147, 5
        %v1150 = vor.u32 %v1146, %v1149
        %v1151 = vrot.slane %v1150, 4
        %v1153 = vshll.u32 %v832, 16
        %v1155 = vrot.slane %v1153, 5
        %v1156 = vsel %vm239, %v1151, %v1155
        %v1157 = vshrl.u32 %v832, 16
        %v1159 = vrot.slane %v1157, 4
        %v1160 = vor.u32 %v1159, %v1155
        %v1161 = vrot.slane %v1160, 4
        %v1163 = vshll.u32 %v851, 16
        %v1165 = vrot.slane %v1163, 5
        %v1166 = vsel %vm239, %v1161, %v1165
        %v1168 = vshrl.u32 %v833, 16
        %v1170 = vrot.slane %v1168, 4
        %v1171 = vshll.u32 %v833, 16
        %v1173 = vrot.slane %v1171, 5
        %v1174 = vor.u32 %v1170, %v1173
        %v1175 = vrot.slane %v1174, 4
        %v1177 = vshll.u32 %v834, 16
        %v1179 = vrot.slane %v1177, 5
        %v1180 = vsel %vm239, %v1175, %v1179
        %v1181 = vshrl.u32 %v834, 16
        %v1183 = vrot.slane %v1181, 4
        %v1184 = vor.u32 %v1183, %v1179
        %v1185 = vrot.slane %v1184, 4
        %v1187 = vshll.u32 %v852, 16
        %v1189 = vrot.slane %v1187, 5
        %v1190 = vsel %vm239, %v1185, %v1189
        %v1192 = vshrl.u32 %v835, 16
        %v1194 = vrot.slane %v1192, 4
        %v1195 = vshll.u32 %v835, 16
        %v1197 = vrot.slane %v1195, 5
        %v1198 = vor.u32 %v1194, %v1197
        %v1199 = vrot.slane %v1198, 4
        %v1201 = vshll.u32 %v836, 16
        %v1203 = vrot.slane %v1201, 5
        %v1204 = vsel %vm239, %v1199, %v1203
        %v1205 = vshrl.u32 %v836, 16
        %v1207 = vrot.slane %v1205, 4
        %v1208 = vor.u32 %v1207, %v1203
        %v1209 = vrot.slane %v1208, 4
        %v1211 = vshll.u32 %v853, 16
        %v1213 = vrot.slane %v1211, 5
        %v1214 = vsel %vm239, %v1209, %v1213
        %v1216 = vshrl.u32 %v837, 16
        %v1218 = vrot.slane %v1216, 4
        %v1219 = vshll.u32 %v837, 16
        %v1221 = vrot.slane %v1219, 5
        %v1222 = vor.u32 %v1218, %v1221
        %v1223 = vrot.slane %v1222, 4
        %v1225 = vshll.u32 %v838, 16
        %v1227 = vrot.slane %v1225, 5
        %v1228 = vsel %vm239, %v1223, %v1227
        %v1229 = vshrl.u32 %v838, 16
        %v1231 = vrot.slane %v1229, 4
        %v1232 = vor.u32 %v1231, %v1227
        %v1233 = vrot.slane %v1232, 4
        %v1235 = vshll.u32 %v854, 16
        %v1237 = vrot.slane %v1235, 5
        %v1238 = vsel %vm239, %v1233, %v1237
        %v1239 = vld [vmem:[%s806] sm:$0xe]
        %v1240 = vld [vmem:[%s806 + $0xc] sm:$0xe]
        %v1241 = vld [vmem:[%s806 + $0x18] sm:$0xe]
        %v1242 = vld [vmem:[%s806 + $0x24] sm:$0xe]
        %v1243 = vld [vmem:[%s806 + $0x30] sm:$0xe]
        %v1244 = vld [vmem:[%s806 + $0x3c] sm:$0xe]
        %v1245 = vld [vmem:[%s806 + $0x48] sm:$0xe]
        %v1246 = vld [vmem:[%s806 + $0x54] sm:$0xe]
        %v1247 = vld [vmem:[%s806 + $0x60] sm:$0xe]
        %v1248 = vld [vmem:[%s806 + $0x6c] sm:$0xe]
        %v1249 = vld [vmem:[%s806 + $0x78] sm:$0xe]
        %v1250 = vld [vmem:[%s806 + $0x84] sm:$0xe]
        %v1251 = vld [vmem:[%s806 + $0x90] sm:$0xe]
        %v1252 = vld [vmem:[%s806 + $0x9c] sm:$0xe]
        %v1253 = vld [vmem:[%s806 + $0xa8] sm:$0xe]
        %v1254 = vld [vmem:[%s806 + $0xb4] sm:$0xe]
        %v1303 = vrot.slane %v1239, 5
        %v1304 = vrot.slane %v1303, 4
        %v1305 = vrot.slane %v808, 5
        %v1306 = vsel %vm690, %v1304, %v1305
        %v1307 = vrot.slane %v1305, 4
        %v1308 = vrot.slane %v839, 5
        %v1309 = vsel %vm690, %v1307, %v1308
        %v1310 = vrot.slane %v1240, 5
        %v1311 = vrot.slane %v1310, 4
        %v1312 = vrot.slane %v810, 5
        %v1313 = vsel %vm690, %v1311, %v1312
        %v1314 = vrot.slane %v1312, 4
        %v1315 = vrot.slane %v840, 5
        %v1316 = vsel %vm690, %v1314, %v1315
        %v1317 = vrot.slane %v1241, 5
        %v1318 = vrot.slane %v1317, 4
        %v1319 = vrot.slane %v812, 5
        %v1320 = vsel %vm690, %v1318, %v1319
        %v1321 = vrot.slane %v1319, 4
        %v1322 = vrot.slane %v841, 5
        %v1323 = vsel %vm690, %v1321, %v1322
        %v1324 = vrot.slane %v1242, 5
        %v1325 = vrot.slane %v1324, 4
        %v1326 = vrot.slane %v814, 5
        %v1327 = vsel %vm690, %v1325, %v1326
        %v1328 = vrot.slane %v1326, 4
        %v1329 = vrot.slane %v842, 5
        %v1330 = vsel %vm690, %v1328, %v1329
        %v1331 = vrot.slane %v1243, 5
        %v1332 = vrot.slane %v1331, 4
        %v1333 = vrot.slane %v816, 5
        %v1334 = vsel %vm690, %v1332, %v1333
        %v1335 = vrot.slane %v1333, 4
        %v1336 = vrot.slane %v843, 5
        %v1337 = vsel %vm690, %v1335, %v1336
        %v1338 = vrot.slane %v1244, 5
        %v1339 = vrot.slane %v1338, 4
        %v1340 = vrot.slane %v818, 5
        %v1341 = vsel %vm690, %v1339, %v1340
        %v1342 = vrot.slane %v1340, 4
        %v1343 = vrot.slane %v844, 5
        %v1344 = vsel %vm690, %v1342, %v1343
        %v1345 = vrot.slane %v1245, 5
        %v1346 = vrot.slane %v1345, 4
        %v1347 = vrot.slane %v820, 5
        %v1348 = vsel %vm690, %v1346, %v1347
        %v1349 = vrot.slane %v1347, 4
        %v1350 = vrot.slane %v845, 5
        %v1351 = vsel %vm690, %v1349, %v1350
        %v1352 = vrot.slane %v1246, 5
        %v1353 = vrot.slane %v1352, 4
        %v1354 = vrot.slane %v822, 5
        %v1355 = vsel %vm690, %v1353, %v1354
        %v1356 = vrot.slane %v1354, 4
        %v1357 = vrot.slane %v846, 5
        %v1358 = vsel %vm690, %v1356, %v1357
        %v1359 = vrot.slane %v1247, 5
        %v1360 = vrot.slane %v1359, 4
        %v1361 = vrot.slane %v824, 5
        %v1362 = vsel %vm690, %v1360, %v1361
        %v1363 = vrot.slane %v1361, 4
        %v1364 = vrot.slane %v847, 5
        %v1365 = vsel %vm690, %v1363, %v1364
        %v1366 = vrot.slane %v1248, 5
        %v1367 = vrot.slane %v1366, 4
        %v1368 = vrot.slane %v826, 5
        %v1369 = vsel %vm690, %v1367, %v1368
        %v1370 = vrot.slane %v1368, 4
        %v1371 = vrot.slane %v848, 5
        %v1372 = vsel %vm690, %v1370, %v1371
        %v1373 = vrot.slane %v1249, 5
        %v1374 = vrot.slane %v1373, 4
        %v1375 = vrot.slane %v828, 5
        %v1376 = vsel %vm690, %v1374, %v1375
        %v1377 = vrot.slane %v1375, 4
        %v1378 = vrot.slane %v849, 5
        %v1379 = vsel %vm690, %v1377, %v1378
        %v1380 = vrot.slane %v1250, 5
        %v1381 = vrot.slane %v1380, 4
        %v1382 = vrot.slane %v830, 5
        %v1383 = vsel %vm690, %v1381, %v1382
        %v1384 = vrot.slane %v1382, 4
        %v1385 = vrot.slane %v850, 5
        %v1386 = vsel %vm690, %v1384, %v1385
        %v1387 = vrot.slane %v1251, 5
        %v1388 = vrot.slane %v1387, 4
        %v1389 = vrot.slane %v832, 5
        %v1390 = vsel %vm690, %v1388, %v1389
        %v1391 = vrot.slane %v1389, 4
        %v1392 = vrot.slane %v851, 5
        %v1393 = vsel %vm690, %v1391, %v1392
        %v1394 = vrot.slane %v1252, 5
        %v1395 = vrot.slane %v1394, 4
        %v1396 = vrot.slane %v834, 5
        %v1397 = vsel %vm690, %v1395, %v1396
        %v1398 = vrot.slane %v1396, 4
        %v1399 = vrot.slane %v852, 5
        %v1400 = vsel %vm690, %v1398, %v1399
        %v1401 = vrot.slane %v1253, 5
        %v1402 = vrot.slane %v1401, 4
        %v1403 = vrot.slane %v836, 5
        %v1404 = vsel %vm690, %v1402, %v1403
        %v1405 = vrot.slane %v1403, 4
        %v1406 = vrot.slane %v853, 5
        %v1407 = vsel %vm690, %v1405, %v1406
        %v1408 = vrot.slane %v1254, 5
        %v1409 = vrot.slane %v1408, 4
        %v1410 = vrot.slane %v838, 5
        %v1411 = vsel %vm690, %v1409, %v1410
        %v1412 = vrot.slane %v1410, 4
        %v1413 = vrot.slane %v854, 5
        %v1414 = vsel %vm690, %v1412, %v1413
        %s1415 = sadd.s32 %s185, 2
        %s1416 = smul.u32 %s1415, 3
        %s1417 = smul.addr %s1416, 4
        %s1418 = scalar_lea.vmem %s182, %s1417
        %v1419 = vld [vmem:[%s1418] sm:$0xf]
        %v1420 = vld [vmem:[%s1418 + $0x4] sm:$0xf]
        %v1421 = vld [vmem:[%s1418 + $0xc] sm:$0xf]
        %v1422 = vld [vmem:[%s1418 + $0x10] sm:$0xf]
        %v1423 = vld [vmem:[%s1418 + $0x18] sm:$0xf]
        %v1424 = vld [vmem:[%s1418 + $0x1c] sm:$0xf]
        %v1425 = vld [vmem:[%s1418 + $0x24] sm:$0xf]
        %v1426 = vld [vmem:[%s1418 + $0x28] sm:$0xf]
        %v1427 = vld [vmem:[%s1418 + $0x30] sm:$0xf]
        %v1428 = vld [vmem:[%s1418 + $0x34] sm:$0xf]
        %v1429 = vld [vmem:[%s1418 + $0x3c] sm:$0xf]
        %v1430 = vld [vmem:[%s1418 + $0x40] sm:$0xf]
        %v1431 = vld [vmem:[%s1418 + $0x48] sm:$0xf]
        %v1432 = vld [vmem:[%s1418 + $0x4c] sm:$0xf]
        %v1433 = vld [vmem:[%s1418 + $0x54] sm:$0xf]
        %v1434 = vld [vmem:[%s1418 + $0x58] sm:$0xf]
        %v1435 = vld [vmem:[%s1418 + $0x60] sm:$0xf]
        %v1436 = vld [vmem:[%s1418 + $0x64] sm:$0xf]
        %v1437 = vld [vmem:[%s1418 + $0x6c] sm:$0xf]
        %v1438 = vld [vmem:[%s1418 + $0x70] sm:$0xf]
        %v1439 = vld [vmem:[%s1418 + $0x78] sm:$0xf]
        %v1440 = vld [vmem:[%s1418 + $0x7c] sm:$0xf]
        %v1441 = vld [vmem:[%s1418 + $0x84] sm:$0xf]
        %v1442 = vld [vmem:[%s1418 + $0x88] sm:$0xf]
        %v1443 = vld [vmem:[%s1418 + $0x90] sm:$0xf]
        %v1444 = vld [vmem:[%s1418 + $0x94] sm:$0xf]
        %v1445 = vld [vmem:[%s1418 + $0x9c] sm:$0xf]
        %v1446 = vld [vmem:[%s1418 + $0xa0] sm:$0xf]
        %v1447 = vld [vmem:[%s1418 + $0xa8] sm:$0xf]
        %v1448 = vld [vmem:[%s1418 + $0xac] sm:$0xf]
        %v1449 = vld [vmem:[%s1418 + $0xb4] sm:$0xf]
        %v1450 = vld [vmem:[%s1418 + $0xb8] sm:$0xf]
        %v1451 = vld [vmem:[%s1418 + $0x8] sm:$0x1]
        %v1452 = vld [vmem:[%s1418 + $0x14] sm:$0x1]
        %v1453 = vld [vmem:[%s1418 + $0x20] sm:$0x1]
        %v1454 = vld [vmem:[%s1418 + $0x2c] sm:$0x1]
        %v1455 = vld [vmem:[%s1418 + $0x38] sm:$0x1]
        %v1456 = vld [vmem:[%s1418 + $0x44] sm:$0x1]
        %v1457 = vld [vmem:[%s1418 + $0x50] sm:$0x1]
        %v1458 = vld [vmem:[%s1418 + $0x5c] sm:$0x1]
        %v1459 = vld [vmem:[%s1418 + $0x68] sm:$0x1]
        %v1460 = vld [vmem:[%s1418 + $0x74] sm:$0x1]
        %v1461 = vld [vmem:[%s1418 + $0x80] sm:$0x1]
        %v1462 = vld [vmem:[%s1418 + $0x8c] sm:$0x1]
        %v1463 = vld [vmem:[%s1418 + $0x98] sm:$0x1]
        %v1464 = vld [vmem:[%s1418 + $0xa4] sm:$0x1]
        %v1465 = vld [vmem:[%s1418 + $0xb0] sm:$0x1]
        %v1466 = vld [vmem:[%s1418 + $0xbc] sm:$0x1]
        %v1468 = vshrl.u32 %v1419, 16
        %v1470 = vrot.slane %v1468, 4
        %v1471 = vshll.u32 %v1419, 16
        %v1473 = vrot.slane %v1471, 5
        %v1474 = vor.u32 %v1470, %v1473
        %v1475 = vrot.slane %v1474, 4
        %v1477 = vshll.u32 %v1420, 16
        %v1479 = vrot.slane %v1477, 5
        %v1480 = vsel %vm239, %v1475, %v1479
        %v1481 = vshrl.u32 %v1420, 16
        %v1483 = vrot.slane %v1481, 4
        %v1484 = vor.u32 %v1483, %v1479
        %v1485 = vrot.slane %v1484, 4
        %v1487 = vshll.u32 %v1451, 16
        %v1489 = vrot.slane %v1487, 5
        %v1490 = vsel %vm239, %v1485, %v1489
        %v1492 = vshrl.u32 %v1421, 16
        %v1494 = vrot.slane %v1492, 4
        %v1495 = vshll.u32 %v1421, 16
        %v1497 = vrot.slane %v1495, 5
        %v1498 = vor.u32 %v1494, %v1497
        %v1499 = vrot.slane %v1498, 4
        %v1501 = vshll.u32 %v1422, 16
        %v1503 = vrot.slane %v1501, 5
        %v1504 = vsel %vm239, %v1499, %v1503
        %v1505 = vshrl.u32 %v1422, 16
        %v1507 = vrot.slane %v1505, 4
        %v1508 = vor.u32 %v1507, %v1503
        %v1509 = vrot.slane %v1508, 4
        %v1511 = vshll.u32 %v1452, 16
        %v1513 = vrot.slane %v1511, 5
        %v1514 = vsel %vm239, %v1509, %v1513
        %v1516 = vshrl.u32 %v1423, 16
        %v1518 = vrot.slane %v1516, 4
        %v1519 = vshll.u32 %v1423, 16
        %v1521 = vrot.slane %v1519, 5
        %v1522 = vor.u32 %v1518, %v1521
        %v1523 = vrot.slane %v1522, 4
        %v1525 = vshll.u32 %v1424, 16
        %v1527 = vrot.slane %v1525, 5
        %v1528 = vsel %vm239, %v1523, %v1527
        %v1529 = vshrl.u32 %v1424, 16
        %v1531 = vrot.slane %v1529, 4
        %v1532 = vor.u32 %v1531, %v1527
        %v1533 = vrot.slane %v1532, 4
        %v1535 = vshll.u32 %v1453, 16
        %v1537 = vrot.slane %v1535, 5
        %v1538 = vsel %vm239, %v1533, %v1537
        %v1540 = vshrl.u32 %v1425, 16
        %v1542 = vrot.slane %v1540, 4
        %v1543 = vshll.u32 %v1425, 16
        %v1545 = vrot.slane %v1543, 5
        %v1546 = vor.u32 %v1542, %v1545
        %v1547 = vrot.slane %v1546, 4
        %v1549 = vshll.u32 %v1426, 16
        %v1551 = vrot.slane %v1549, 5
        %v1552 = vsel %vm239, %v1547, %v1551
        %v1553 = vshrl.u32 %v1426, 16
        %v1555 = vrot.slane %v1553, 4
        %v1556 = vor.u32 %v1555, %v1551
        %v1557 = vrot.slane %v1556, 4
        %v1559 = vshll.u32 %v1454, 16
        %v1561 = vrot.slane %v1559, 5
        %v1562 = vsel %vm239, %v1557, %v1561
        %v1564 = vshrl.u32 %v1427, 16
        %v1566 = vrot.slane %v1564, 4
        %v1567 = vshll.u32 %v1427, 16
        %v1569 = vrot.slane %v1567, 5
        %v1570 = vor.u32 %v1566, %v1569
        %v1571 = vrot.slane %v1570, 4
        %v1573 = vshll.u32 %v1428, 16
        %v1575 = vrot.slane %v1573, 5
        %v1576 = vsel %vm239, %v1571, %v1575
        %v1577 = vshrl.u32 %v1428, 16
        %v1579 = vrot.slane %v1577, 4
        %v1580 = vor.u32 %v1579, %v1575
        %v1581 = vrot.slane %v1580, 4
        %v1583 = vshll.u32 %v1455, 16
        %v1585 = vrot.slane %v1583, 5
        %v1586 = vsel %vm239, %v1581, %v1585
        %v1588 = vshrl.u32 %v1429, 16
        %v1590 = vrot.slane %v1588, 4
        %v1591 = vshll.u32 %v1429, 16
        %v1593 = vrot.slane %v1591, 5
        %v1594 = vor.u32 %v1590, %v1593
        %v1595 = vrot.slane %v1594, 4
        %v1597 = vshll.u32 %v1430, 16
        %v1599 = vrot.slane %v1597, 5
        %v1600 = vsel %vm239, %v1595, %v1599
        %v1601 = vshrl.u32 %v1430, 16
        %v1603 = vrot.slane %v1601, 4
        %v1604 = vor.u32 %v1603, %v1599
        %v1605 = vrot.slane %v1604, 4
        %v1607 = vshll.u32 %v1456, 16
        %v1609 = vrot.slane %v1607, 5
        %v1610 = vsel %vm239, %v1605, %v1609
        %v1612 = vshrl.u32 %v1431, 16
        %v1614 = vrot.slane %v1612, 4
        %v1615 = vshll.u32 %v1431, 16
        %v1617 = vrot.slane %v1615, 5
        %v1618 = vor.u32 %v1614, %v1617
        %v1619 = vrot.slane %v1618, 4
        %v1621 = vshll.u32 %v1432, 16
        %v1623 = vrot.slane %v1621, 5
        %v1624 = vsel %vm239, %v1619, %v1623
        %v1625 = vshrl.u32 %v1432, 16
        %v1627 = vrot.slane %v1625, 4
        %v1628 = vor.u32 %v1627, %v1623
        %v1629 = vrot.slane %v1628, 4
        %v1631 = vshll.u32 %v1457, 16
        %v1633 = vrot.slane %v1631, 5
        %v1634 = vsel %vm239, %v1629, %v1633
        %v1636 = vshrl.u32 %v1433, 16
        %v1638 = vrot.slane %v1636, 4
        %v1639 = vshll.u32 %v1433, 16
        %v1641 = vrot.slane %v1639, 5
        %v1642 = vor.u32 %v1638, %v1641
        %v1643 = vrot.slane %v1642, 4
        %v1645 = vshll.u32 %v1434, 16
        %v1647 = vrot.slane %v1645, 5
        %v1648 = vsel %vm239, %v1643, %v1647
        %v1649 = vshrl.u32 %v1434, 16
        %v1651 = vrot.slane %v1649, 4
        %v1652 = vor.u32 %v1651, %v1647
        %v1653 = vrot.slane %v1652, 4
        %v1655 = vshll.u32 %v1458, 16
        %v1657 = vrot.slane %v1655, 5
        %v1658 = vsel %vm239, %v1653, %v1657
        %v1660 = vshrl.u32 %v1435, 16
        %v1662 = vrot.slane %v1660, 4
        %v1663 = vshll.u32 %v1435, 16
        %v1665 = vrot.slane %v1663, 5
        %v1666 = vor.u32 %v1662, %v1665
        %v1667 = vrot.slane %v1666, 4
        %v1669 = vshll.u32 %v1436, 16
        %v1671 = vrot.slane %v1669, 5
        %v1672 = vsel %vm239, %v1667, %v1671
        %v1673 = vshrl.u32 %v1436, 16
        %v1675 = vrot.slane %v1673, 4
        %v1676 = vor.u32 %v1675, %v1671
        %v1677 = vrot.slane %v1676, 4
        %v1679 = vshll.u32 %v1459, 16
        %v1681 = vrot.slane %v1679, 5
        %v1682 = vsel %vm239, %v1677, %v1681
        %v1684 = vshrl.u32 %v1437, 16
        %v1686 = vrot.slane %v1684, 4
        %v1687 = vshll.u32 %v1437, 16
        %v1689 = vrot.slane %v1687, 5
        %v1690 = vor.u32 %v1686, %v1689
        %v1691 = vrot.slane %v1690, 4
        %v1693 = vshll.u32 %v1438, 16
        %v1695 = vrot.slane %v1693, 5
        %v1696 = vsel %vm239, %v1691, %v1695
        %v1697 = vshrl.u32 %v1438, 16
        %v1699 = vrot.slane %v1697, 4
        %v1700 = vor.u32 %v1699, %v1695
        %v1701 = vrot.slane %v1700, 4
        %v1703 = vshll.u32 %v1460, 16
        %v1705 = vrot.slane %v1703, 5
        %v1706 = vsel %vm239, %v1701, %v1705
        %v1708 = vshrl.u32 %v1439, 16
        %v1710 = vrot.slane %v1708, 4
        %v1711 = vshll.u32 %v1439, 16
        %v1713 = vrot.slane %v1711, 5
        %v1714 = vor.u32 %v1710, %v1713
        %v1715 = vrot.slane %v1714, 4
        %v1717 = vshll.u32 %v1440, 16
        %v1719 = vrot.slane %v1717, 5
        %v1720 = vsel %vm239, %v1715, %v1719
        %v1721 = vshrl.u32 %v1440, 16
        %v1723 = vrot.slane %v1721, 4
        %v1724 = vor.u32 %v1723, %v1719
        %v1725 = vrot.slane %v1724, 4
        %v1727 = vshll.u32 %v1461, 16
        %v1729 = vrot.slane %v1727, 5
        %v1730 = vsel %vm239, %v1725, %v1729
        %v1732 = vshrl.u32 %v1441, 16
        %v1734 = vrot.slane %v1732, 4
        %v1735 = vshll.u32 %v1441, 16
        %v1737 = vrot.slane %v1735, 5
        %v1738 = vor.u32 %v1734, %v1737
        %v1739 = vrot.slane %v1738, 4
        %v1741 = vshll.u32 %v1442, 16
        %v1743 = vrot.slane %v1741, 5
        %v1744 = vsel %vm239, %v1739, %v1743
        %v1745 = vshrl.u32 %v1442, 16
        %v1747 = vrot.slane %v1745, 4
        %v1748 = vor.u32 %v1747, %v1743
        %v1749 = vrot.slane %v1748, 4
        %v1751 = vshll.u32 %v1462, 16
        %v1753 = vrot.slane %v1751, 5
        %v1754 = vsel %vm239, %v1749, %v1753
        %v1756 = vshrl.u32 %v1443, 16
        %v1758 = vrot.slane %v1756, 4
        %v1759 = vshll.u32 %v1443, 16
        %v1761 = vrot.slane %v1759, 5
        %v1762 = vor.u32 %v1758, %v1761
        %v1763 = vrot.slane %v1762, 4
        %v1765 = vshll.u32 %v1444, 16
        %v1767 = vrot.slane %v1765, 5
        %v1768 = vsel %vm239, %v1763, %v1767
        %v1769 = vshrl.u32 %v1444, 16
        %v1771 = vrot.slane %v1769, 4
        %v1772 = vor.u32 %v1771, %v1767
        %v1773 = vrot.slane %v1772, 4
        %v1775 = vshll.u32 %v1463, 16
        %v1777 = vrot.slane %v1775, 5
        %v1778 = vsel %vm239, %v1773, %v1777
        %v1780 = vshrl.u32 %v1445, 16
        %v1782 = vrot.slane %v1780, 4
        %v1783 = vshll.u32 %v1445, 16
        %v1785 = vrot.slane %v1783, 5
        %v1786 = vor.u32 %v1782, %v1785
        %v1787 = vrot.slane %v1786, 4
        %v1789 = vshll.u32 %v1446, 16
        %v1791 = vrot.slane %v1789, 5
        %v1792 = vsel %vm239, %v1787, %v1791
        %v1793 = vshrl.u32 %v1446, 16
        %v1795 = vrot.slane %v1793, 4
        %v1796 = vor.u32 %v1795, %v1791
        %v1797 = vrot.slane %v1796, 4
        %v1799 = vshll.u32 %v1464, 16
        %v1801 = vrot.slane %v1799, 5
        %v1802 = vsel %vm239, %v1797, %v1801
        %v1804 = vshrl.u32 %v1447, 16
        %v1806 = vrot.slane %v1804, 4
        %v1807 = vshll.u32 %v1447, 16
        %v1809 = vrot.slane %v1807, 5
        %v1810 = vor.u32 %v1806, %v1809
        %v1811 = vrot.slane %v1810, 4
        %v1813 = vshll.u32 %v1448, 16
        %v1815 = vrot.slane %v1813, 5
        %v1816 = vsel %vm239, %v1811, %v1815
        %v1817 = vshrl.u32 %v1448, 16
        %v1819 = vrot.slane %v1817, 4
        %v1820 = vor.u32 %v1819, %v1815
        %v1821 = vrot.slane %v1820, 4
        %v1823 = vshll.u32 %v1465, 16
        %v1825 = vrot.slane %v1823, 5
        %v1826 = vsel %vm239, %v1821, %v1825
        %v1828 = vshrl.u32 %v1449, 16
        %v1830 = vrot.slane %v1828, 4
        %v1831 = vshll.u32 %v1449, 16
        %v1833 = vrot.slane %v1831, 5
        %v1834 = vor.u32 %v1830, %v1833
        %v1835 = vrot.slane %v1834, 4
        %v1837 = vshll.u32 %v1450, 16
        %v1839 = vrot.slane %v1837, 5
        %v1840 = vsel %vm239, %v1835, %v1839
        %v1841 = vshrl.u32 %v1450, 16
        %v1843 = vrot.slane %v1841, 4
        %v1844 = vor.u32 %v1843, %v1839
        %v1845 = vrot.slane %v1844, 4
        %v1847 = vshll.u32 %v1466, 16
        %v1849 = vrot.slane %v1847, 5
        %v1850 = vsel %vm239, %v1845, %v1849
        %v1851 = vld [vmem:[%s1418] sm:$0xe]
        %v1852 = vld [vmem:[%s1418 + $0xc] sm:$0xe]
        %v1853 = vld [vmem:[%s1418 + $0x18] sm:$0xe]
        %v1854 = vld [vmem:[%s1418 + $0x24] sm:$0xe]
        %v1855 = vld [vmem:[%s1418 + $0x30] sm:$0xe]
        %v1856 = vld [vmem:[%s1418 + $0x3c] sm:$0xe]
        %v1857 = vld [vmem:[%s1418 + $0x48] sm:$0xe]
        %v1858 = vld [vmem:[%s1418 + $0x54] sm:$0xe]
        %v1859 = vld [vmem:[%s1418 + $0x60] sm:$0xe]
        %v1860 = vld [vmem:[%s1418 + $0x6c] sm:$0xe]
        %v1861 = vld [vmem:[%s1418 + $0x78] sm:$0xe]
        %v1862 = vld [vmem:[%s1418 + $0x84] sm:$0xe]
        %v1863 = vld [vmem:[%s1418 + $0x90] sm:$0xe]
        %v1864 = vld [vmem:[%s1418 + $0x9c] sm:$0xe]
        %v1865 = vld [vmem:[%s1418 + $0xa8] sm:$0xe]
        %v1866 = vld [vmem:[%s1418 + $0xb4] sm:$0xe]
        %v1915 = vrot.slane %v1851, 5
        %v1916 = vrot.slane %v1915, 4
        %v1917 = vrot.slane %v1420, 5
        %v1918 = vsel %vm690, %v1916, %v1917
        %v1919 = vrot.slane %v1917, 4
        %v1920 = vrot.slane %v1451, 5
        %v1921 = vsel %vm690, %v1919, %v1920
        %v1922 = vrot.slane %v1852, 5
        %v1923 = vrot.slane %v1922, 4
        %v1924 = vrot.slane %v1422, 5
        %v1925 = vsel %vm690, %v1923, %v1924
        %v1926 = vrot.slane %v1924, 4
        %v1927 = vrot.slane %v1452, 5
        %v1928 = vsel %vm690, %v1926, %v1927
        %v1929 = vrot.slane %v1853, 5
        %v1930 = vrot.slane %v1929, 4
        %v1931 = vrot.slane %v1424, 5
        %v1932 = vsel %vm690, %v1930, %v1931
        %v1933 = vrot.slane %v1931, 4
        %v1934 = vrot.slane %v1453, 5
        %v1935 = vsel %vm690, %v1933, %v1934
        %v1936 = vrot.slane %v1854, 5
        %v1937 = vrot.slane %v1936, 4
        %v1938 = vrot.slane %v1426, 5
        %v1939 = vsel %vm690, %v1937, %v1938
        %v1940 = vrot.slane %v1938, 4
        %v1941 = vrot.slane %v1454, 5
        %v1942 = vsel %vm690, %v1940, %v1941
        %v1943 = vrot.slane %v1855, 5
        %v1944 = vrot.slane %v1943, 4
        %v1945 = vrot.slane %v1428, 5
        %v1946 = vsel %vm690, %v1944, %v1945
        %v1947 = vrot.slane %v1945, 4
        %v1948 = vrot.slane %v1455, 5
        %v1949 = vsel %vm690, %v1947, %v1948
        %v1950 = vrot.slane %v1856, 5
        %v1951 = vrot.slane %v1950, 4
        %v1952 = vrot.slane %v1430, 5
        %v1953 = vsel %vm690, %v1951, %v1952
        %v1954 = vrot.slane %v1952, 4
        %v1955 = vrot.slane %v1456, 5
        %v1956 = vsel %vm690, %v1954, %v1955
        %v1957 = vrot.slane %v1857, 5
        %v1958 = vrot.slane %v1957, 4
        %v1959 = vrot.slane %v1432, 5
        %v1960 = vsel %vm690, %v1958, %v1959
        %v1961 = vrot.slane %v1959, 4
        %v1962 = vrot.slane %v1457, 5
        %v1963 = vsel %vm690, %v1961, %v1962
        %v1964 = vrot.slane %v1858, 5
        %v1965 = vrot.slane %v1964, 4
        %v1966 = vrot.slane %v1434, 5
        %v1967 = vsel %vm690, %v1965, %v1966
        %v1968 = vrot.slane %v1966, 4
        %v1969 = vrot.slane %v1458, 5
        %v1970 = vsel %vm690, %v1968, %v1969
        %v1971 = vrot.slane %v1859, 5
        %v1972 = vrot.slane %v1971, 4
        %v1973 = vrot.slane %v1436, 5
        %v1974 = vsel %vm690, %v1972, %v1973
        %v1975 = vrot.slane %v1973, 4
        %v1976 = vrot.slane %v1459, 5
        %v1977 = vsel %vm690, %v1975, %v1976
        %v1978 = vrot.slane %v1860, 5
        %v1979 = vrot.slane %v1978, 4
        %v1980 = vrot.slane %v1438, 5
        %v1981 = vsel %vm690, %v1979, %v1980
        %v1982 = vrot.slane %v1980, 4
        %v1983 = vrot.slane %v1460, 5
        %v1984 = vsel %vm690, %v1982, %v1983
        %v1985 = vrot.slane %v1861, 5
        %v1986 = vrot.slane %v1985, 4
        %v1987 = vrot.slane %v1440, 5
        %v1988 = vsel %vm690, %v1986, %v1987
        %v1989 = vrot.slane %v1987, 4
        %v1990 = vrot.slane %v1461, 5
        %v1991 = vsel %vm690, %v1989, %v1990
        %v1992 = vrot.slane %v1862, 5
        %v1993 = vrot.slane %v1992, 4
        %v1994 = vrot.slane %v1442, 5
        %v1995 = vsel %vm690, %v1993, %v1994
        %v1996 = vrot.slane %v1994, 4
        %v1997 = vrot.slane %v1462, 5
        %v1998 = vsel %vm690, %v1996, %v1997
        %v1999 = vrot.slane %v1863, 5
        %v2000 = vrot.slane %v1999, 4
        %v2001 = vrot.slane %v1444, 5
        %v2002 = vsel %vm690, %v2000, %v2001
        %v2003 = vrot.slane %v2001, 4
        %v2004 = vrot.slane %v1463, 5
        %v2005 = vsel %vm690, %v2003, %v2004
        %v2006 = vrot.slane %v1864, 5
        %v2007 = vrot.slane %v2006, 4
        %v2008 = vrot.slane %v1446, 5
        %v2009 = vsel %vm690, %v2007, %v2008
        %v2010 = vrot.slane %v2008, 4
        %v2011 = vrot.slane %v1464, 5
        %v2012 = vsel %vm690, %v2010, %v2011
        %v2013 = vrot.slane %v1865, 5
        %v2014 = vrot.slane %v2013, 4
        %v2015 = vrot.slane %v1448, 5
        %v2016 = vsel %vm690, %v2014, %v2015
        %v2017 = vrot.slane %v2015, 4
        %v2018 = vrot.slane %v1465, 5
        %v2019 = vsel %vm690, %v2017, %v2018
        %v2020 = vrot.slane %v1866, 5
        %v2021 = vrot.slane %v2020, 4
        %v2022 = vrot.slane %v1450, 5
        %v2023 = vsel %vm690, %v2021, %v2022
        %v2024 = vrot.slane %v2022, 4
        %v2025 = vrot.slane %v1466, 5
        %v2026 = vsel %vm690, %v2024, %v2025
        %v2043 = vunpack.c.l.b16 %v189
        %v2044 = vunpack.c.l.b16 %v190
        %v2045 = vunpack.c.l.b16 %v191
        %v2046 = vunpack.c.l.b16 %v192
        %v2047 = vunpack.c.l.b16 %v193
        %v2048 = vunpack.c.l.b16 %v194
        %v2049 = vunpack.c.l.b16 %v195
        %v2050 = vunpack.c.l.b16 %v196
        %v2051 = vunpack.c.l.b16 %v197
        %v2052 = vunpack.c.l.b16 %v198
        %v2053 = vunpack.c.l.b16 %v199
        %v2054 = vunpack.c.l.b16 %v200
        %v2055 = vunpack.c.l.b16 %v201
        %v2056 = vunpack.c.l.b16 %v202
        %v2057 = vunpack.c.l.b16 %v203
        %v2058 = vunpack.c.l.b16 %v204
        %v2059 = vunpack.c.l.b16 %v205
        %v2060 = vunpack.c.l.b16 %v206
        %v2061 = vunpack.c.l.b16 %v207
        %v2062 = vunpack.c.l.b16 %v208
        %v2063 = vunpack.c.l.b16 %v209
        %v2064 = vunpack.c.l.b16 %v210
        %v2065 = vunpack.c.l.b16 %v211
        %v2066 = vunpack.c.l.b16 %v212
        %v2067 = vunpack.c.l.b16 %v213
        %v2068 = vunpack.c.l.b16 %v214
        %v2069 = vunpack.c.l.b16 %v215
        %v2070 = vunpack.c.l.b16 %v216
        %v2071 = vunpack.c.l.b16 %v217
        %v2072 = vunpack.c.l.b16 %v218
        %v2073 = vunpack.c.l.b16 %v219
        %v2074 = vunpack.c.l.b16 %v220
        %v2075 = vpack.c.b16 %v2044, %v2043
        %v2076 = vpack.c.b16 %v2046, %v2045
        %v2077 = vpack.c.b16 %v2048, %v2047
        %v2078 = vpack.c.b16 %v2050, %v2049
        %v2079 = vpack.c.b16 %v2052, %v2051
        %v2080 = vpack.c.b16 %v2054, %v2053
        %v2081 = vpack.c.b16 %v2056, %v2055
        %v2082 = vpack.c.b16 %v2058, %v2057
        %v2083 = vpack.c.b16 %v2060, %v2059
        %v2084 = vpack.c.b16 %v2062, %v2061
        %v2085 = vpack.c.b16 %v2064, %v2063
        %v2086 = vpack.c.b16 %v2066, %v2065
        %v2087 = vpack.c.b16 %v2068, %v2067
        %v2088 = vpack.c.b16 %v2070, %v2069
        %v2089 = vpack.c.b16 %v2072, %v2071
        %v2090 = vpack.c.b16 %v2074, %v2073
        %v2091 = vunpack.c.l.b16 %v253
        %v2092 = vunpack.c.l.b16 %v263
        %v2093 = vunpack.c.l.b16 %v277
        %v2094 = vunpack.c.l.b16 %v287
        %v2095 = vunpack.c.l.b16 %v301
        %v2096 = vunpack.c.l.b16 %v311
        %v2097 = vunpack.c.l.b16 %v325
        %v2098 = vunpack.c.l.b16 %v335
        %v2099 = vunpack.c.l.b16 %v349
        %v2100 = vunpack.c.l.b16 %v359
        %v2101 = vunpack.c.l.b16 %v373
        %v2102 = vunpack.c.l.b16 %v383
        %v2103 = vunpack.c.l.b16 %v397
        %v2104 = vunpack.c.l.b16 %v407
        %v2105 = vunpack.c.l.b16 %v421
        %v2106 = vunpack.c.l.b16 %v431
        %v2107 = vunpack.c.l.b16 %v445
        %v2108 = vunpack.c.l.b16 %v455
        %v2109 = vunpack.c.l.b16 %v469
        %v2110 = vunpack.c.l.b16 %v479
        %v2111 = vunpack.c.l.b16 %v493
        %v2112 = vunpack.c.l.b16 %v503
        %v2113 = vunpack.c.l.b16 %v517
        %v2114 = vunpack.c.l.b16 %v527
        %v2115 = vunpack.c.l.b16 %v541
        %v2116 = vunpack.c.l.b16 %v551
        %v2117 = vunpack.c.l.b16 %v565
        %v2118 = vunpack.c.l.b16 %v575
        %v2119 = vunpack.c.l.b16 %v589
        %v2120 = vunpack.c.l.b16 %v599
        %v2121 = vunpack.c.l.b16 %v613
        %v2122 = vunpack.c.l.b16 %v623
        %v2123 = vpack.c.b16 %v2092, %v2091
        %v2124 = vpack.c.b16 %v2094, %v2093
        %v2125 = vpack.c.b16 %v2096, %v2095
        %v2126 = vpack.c.b16 %v2098, %v2097
        %v2127 = vpack.c.b16 %v2100, %v2099
        %v2128 = vpack.c.b16 %v2102, %v2101
        %v2129 = vpack.c.b16 %v2104, %v2103
        %v2130 = vpack.c.b16 %v2106, %v2105
        %v2131 = vpack.c.b16 %v2108, %v2107
        %v2132 = vpack.c.b16 %v2110, %v2109
        %v2133 = vpack.c.b16 %v2112, %v2111
        %v2134 = vpack.c.b16 %v2114, %v2113
        %v2135 = vpack.c.b16 %v2116, %v2115
        %v2136 = vpack.c.b16 %v2118, %v2117
        %v2137 = vpack.c.b16 %v2120, %v2119
        %v2138 = vpack.c.b16 %v2122, %v2121
        %2139 = vrot.lane.b32.xlu0 %v2123, 4
        %v2140 = vpop.permute.xlu0 %2139
        %2141 = vrot.lane.b32.xlu0 %v2124, 4
        %v2142 = vpop.permute.xlu0 %2141
        %2143 = vrot.lane.b32.xlu0 %v2125, 4
        %v2144 = vpop.permute.xlu0 %2143
        %2145 = vrot.lane.b32.xlu0 %v2126, 4
        %v2146 = vpop.permute.xlu0 %2145
        %2147 = vrot.lane.b32.xlu0 %v2127, 4
        %v2148 = vpop.permute.xlu0 %2147
        %2149 = vrot.lane.b32.xlu0 %v2128, 4
        %v2150 = vpop.permute.xlu0 %2149
        %2151 = vrot.lane.b32.xlu0 %v2129, 4
        %v2152 = vpop.permute.xlu0 %2151
        %2153 = vrot.lane.b32.xlu0 %v2130, 4
        %v2154 = vpop.permute.xlu0 %2153
        %2155 = vrot.lane.b32.xlu0 %v2131, 4
        %v2156 = vpop.permute.xlu0 %2155
        %2157 = vrot.lane.b32.xlu0 %v2132, 4
        %v2158 = vpop.permute.xlu0 %2157
        %2159 = vrot.lane.b32.xlu0 %v2133, 4
        %v2160 = vpop.permute.xlu0 %2159
        %2161 = vrot.lane.b32.xlu0 %v2134, 4
        %v2162 = vpop.permute.xlu0 %2161
        %2163 = vrot.lane.b32.xlu0 %v2135, 4
        %v2164 = vpop.permute.xlu0 %2163
        %2165 = vrot.lane.b32.xlu0 %v2136, 4
        %v2166 = vpop.permute.xlu0 %2165
        %2167 = vrot.lane.b32.xlu0 %v2137, 4
        %v2168 = vpop.permute.xlu0 %2167
        %2169 = vrot.lane.b32.xlu0 %v2138, 4
        %v2170 = vpop.permute.xlu0 %2169
        %v2171 = vunpack.c.l.b16 %v694
        %v2172 = vunpack.c.l.b16 %v697
        %v2173 = vunpack.c.l.b16 %v701
        %v2174 = vunpack.c.l.b16 %v704
        %v2175 = vunpack.c.l.b16 %v708
        %v2176 = vunpack.c.l.b16 %v711
        %v2177 = vunpack.c.l.b16 %v715
        %v2178 = vunpack.c.l.b16 %v718
        %v2179 = vunpack.c.l.b16 %v722
        %v2180 = vunpack.c.l.b16 %v725
        %v2181 = vunpack.c.l.b16 %v729
        %v2182 = vunpack.c.l.b16 %v732
        %v2183 = vunpack.c.l.b16 %v736
        %v2184 = vunpack.c.l.b16 %v739
        %v2185 = vunpack.c.l.b16 %v743
        %v2186 = vunpack.c.l.b16 %v746
        %v2187 = vunpack.c.l.b16 %v750
        %v2188 = vunpack.c.l.b16 %v753
        %v2189 = vunpack.c.l.b16 %v757
        %v2190 = vunpack.c.l.b16 %v760
        %v2191 = vunpack.c.l.b16 %v764
        %v2192 = vunpack.c.l.b16 %v767
        %v2193 = vunpack.c.l.b16 %v771
        %v2194 = vunpack.c.l.b16 %v774
        %v2195 = vunpack.c.l.b16 %v778
        %v2196 = vunpack.c.l.b16 %v781
        %v2197 = vunpack.c.l.b16 %v785
        %v2198 = vunpack.c.l.b16 %v788
        %v2199 = vunpack.c.l.b16 %v792
        %v2200 = vunpack.c.l.b16 %v795
        %v2201 = vunpack.c.l.b16 %v799
        %v2202 = vunpack.c.l.b16 %v802
        %v2203 = vpack.c.b16 %v2172, %v2171
        %v2204 = vpack.c.b16 %v2174, %v2173
        %v2205 = vpack.c.b16 %v2176, %v2175
        %v2206 = vpack.c.b16 %v2178, %v2177
        %v2207 = vpack.c.b16 %v2180, %v2179
        %v2208 = vpack.c.b16 %v2182, %v2181
        %v2209 = vpack.c.b16 %v2184, %v2183
        %v2210 = vpack.c.b16 %v2186, %v2185
        %v2211 = vpack.c.b16 %v2188, %v2187
        %v2212 = vpack.c.b16 %v2190, %v2189
        %v2213 = vpack.c.b16 %v2192, %v2191
        %v2214 = vpack.c.b16 %v2194, %v2193
        %v2215 = vpack.c.b16 %v2196, %v2195
        %v2216 = vpack.c.b16 %v2198, %v2197
        %v2217 = vpack.c.b16 %v2200, %v2199
        %v2218 = vpack.c.b16 %v2202, %v2201
        %2219 = vrot.lane.b32.xlu0 %v2203, 8
        %v2220 = vpop.permute.xlu0 %2219
        %2221 = vrot.lane.b32.xlu0 %v2204, 8
        %v2222 = vpop.permute.xlu0 %2221
        %2223 = vrot.lane.b32.xlu0 %v2205, 8
        %v2224 = vpop.permute.xlu0 %2223
        %2225 = vrot.lane.b32.xlu0 %v2206, 8
        %v2226 = vpop.permute.xlu0 %2225
        %2227 = vrot.lane.b32.xlu0 %v2207, 8
        %v2228 = vpop.permute.xlu0 %2227
        %2229 = vrot.lane.b32.xlu0 %v2208, 8
        %v2230 = vpop.permute.xlu0 %2229
        %2231 = vrot.lane.b32.xlu0 %v2209, 8
        %v2232 = vpop.permute.xlu0 %2231
        %2233 = vrot.lane.b32.xlu0 %v2210, 8
        %v2234 = vpop.permute.xlu0 %2233
        %2235 = vrot.lane.b32.xlu0 %v2211, 8
        %v2236 = vpop.permute.xlu0 %2235
        %2237 = vrot.lane.b32.xlu0 %v2212, 8
        %v2238 = vpop.permute.xlu0 %2237
        %2239 = vrot.lane.b32.xlu0 %v2213, 8
        %v2240 = vpop.permute.xlu0 %2239
        %2241 = vrot.lane.b32.xlu0 %v2214, 8
        %v2242 = vpop.permute.xlu0 %2241
        %2243 = vrot.lane.b32.xlu0 %v2215, 8
        %v2244 = vpop.permute.xlu0 %2243
        %2245 = vrot.lane.b32.xlu0 %v2216, 8
        %v2246 = vpop.permute.xlu0 %2245
        %2247 = vrot.lane.b32.xlu0 %v2217, 8
        %v2248 = vpop.permute.xlu0 %2247
        %2249 = vrot.lane.b32.xlu0 %v2218, 8
        %v2250 = vpop.permute.xlu0 %2249
        %v2267 = vunpack.c.l.b16 %v807
        %v2268 = vunpack.c.l.b16 %v808
        %v2269 = vunpack.c.l.b16 %v809
        %v2270 = vunpack.c.l.b16 %v810
        %v2271 = vunpack.c.l.b16 %v811
        %v2272 = vunpack.c.l.b16 %v812
        %v2273 = vunpack.c.l.b16 %v813
        %v2274 = vunpack.c.l.b16 %v814
        %v2275 = vunpack.c.l.b16 %v815
        %v2276 = vunpack.c.l.b16 %v816
        %v2277 = vunpack.c.l.b16 %v817
        %v2278 = vunpack.c.l.b16 %v818
        %v2279 = vunpack.c.l.b16 %v819
        %v2280 = vunpack.c.l.b16 %v820
        %v2281 = vunpack.c.l.b16 %v821
        %v2282 = vunpack.c.l.b16 %v822
        %v2283 = vunpack.c.l.b16 %v823
        %v2284 = vunpack.c.l.b16 %v824
        %v2285 = vunpack.c.l.b16 %v825
        %v2286 = vunpack.c.l.b16 %v826
        %v2287 = vunpack.c.l.b16 %v827
        %v2288 = vunpack.c.l.b16 %v828
        %v2289 = vunpack.c.l.b16 %v829
        %v2290 = vunpack.c.l.b16 %v830
        %v2291 = vunpack.c.l.b16 %v831
        %v2292 = vunpack.c.l.b16 %v832
        %v2293 = vunpack.c.l.b16 %v833
        %v2294 = vunpack.c.l.b16 %v834
        %v2295 = vunpack.c.l.b16 %v835
        %v2296 = vunpack.c.l.b16 %v836
        %v2297 = vunpack.c.l.b16 %v837
        %v2298 = vunpack.c.l.b16 %v838
        %v2299 = vpack.c.b16 %v2268, %v2267
        %v2300 = vpack.c.b16 %v2270, %v2269
        %v2301 = vpack.c.b16 %v2272, %v2271
        %v2302 = vpack.c.b16 %v2274, %v2273
        %v2303 = vpack.c.b16 %v2276, %v2275
        %v2304 = vpack.c.b16 %v2278, %v2277
        %v2305 = vpack.c.b16 %v2280, %v2279
        %v2306 = vpack.c.b16 %v2282, %v2281
        %v2307 = vpack.c.b16 %v2284, %v2283
        %v2308 = vpack.c.b16 %v2286, %v2285
        %v2309 = vpack.c.b16 %v2288, %v2287
        %v2310 = vpack.c.b16 %v2290, %v2289
        %v2311 = vpack.c.b16 %v2292, %v2291
        %v2312 = vpack.c.b16 %v2294, %v2293
        %v2313 = vpack.c.b16 %v2296, %v2295
        %v2314 = vpack.c.b16 %v2298, %v2297
        %2315 = vrot.lane.b32.xlu0 %v2299, 12
        %v2316 = vpop.permute.xlu0 %2315
        %2317 = vrot.lane.b32.xlu0 %v2300, 12
        %v2318 = vpop.permute.xlu0 %2317
        %2319 = vrot.lane.b32.xlu0 %v2301, 12
        %v2320 = vpop.permute.xlu0 %2319
        %2321 = vrot.lane.b32.xlu0 %v2302, 12
        %v2322 = vpop.permute.xlu0 %2321
        %2323 = vrot.lane.b32.xlu0 %v2303, 12
        %v2324 = vpop.permute.xlu0 %2323
        %2325 = vrot.lane.b32.xlu0 %v2304, 12
        %v2326 = vpop.permute.xlu0 %2325
        %2327 = vrot.lane.b32.xlu0 %v2305, 12
        %v2328 = vpop.permute.xlu0 %2327
        %2329 = vrot.lane.b32.xlu0 %v2306, 12
        %v2330 = vpop.permute.xlu0 %2329
        %2331 = vrot.lane.b32.xlu0 %v2307, 12
        %v2332 = vpop.permute.xlu0 %2331
        %2333 = vrot.lane.b32.xlu0 %v2308, 12
        %v2334 = vpop.permute.xlu0 %2333
        %2335 = vrot.lane.b32.xlu0 %v2309, 12
        %v2336 = vpop.permute.xlu0 %2335
        %2337 = vrot.lane.b32.xlu0 %v2310, 12
        %v2338 = vpop.permute.xlu0 %2337
        %2339 = vrot.lane.b32.xlu0 %v2311, 12
        %v2340 = vpop.permute.xlu0 %2339
        %2341 = vrot.lane.b32.xlu0 %v2312, 12
        %v2342 = vpop.permute.xlu0 %2341
        %2343 = vrot.lane.b32.xlu0 %v2313, 12
        %v2344 = vpop.permute.xlu0 %2343
        %2345 = vrot.lane.b32.xlu0 %v2314, 12
        %v2346 = vpop.permute.xlu0 %2345
        %v2347 = vunpack.c.l.b16 %v868
        %v2348 = vunpack.c.l.b16 %v878
        %v2349 = vunpack.c.l.b16 %v892
        %v2350 = vunpack.c.l.b16 %v902
        %v2351 = vunpack.c.l.b16 %v916
        %v2352 = vunpack.c.l.b16 %v926
        %v2353 = vunpack.c.l.b16 %v940
        %v2354 = vunpack.c.l.b16 %v950
        %v2355 = vunpack.c.l.b16 %v964
        %v2356 = vunpack.c.l.b16 %v974
        %v2357 = vunpack.c.l.b16 %v988
        %v2358 = vunpack.c.l.b16 %v998
        %v2359 = vunpack.c.l.b16 %v1012
        %v2360 = vunpack.c.l.b16 %v1022
        %v2361 = vunpack.c.l.b16 %v1036
        %v2362 = vunpack.c.l.b16 %v1046
        %v2363 = vunpack.c.l.b16 %v1060
        %v2364 = vunpack.c.l.b16 %v1070
        %v2365 = vunpack.c.l.b16 %v1084
        %v2366 = vunpack.c.l.b16 %v1094
        %v2367 = vunpack.c.l.b16 %v1108
        %v2368 = vunpack.c.l.b16 %v1118
        %v2369 = vunpack.c.l.b16 %v1132
        %v2370 = vunpack.c.l.b16 %v1142
        %v2371 = vunpack.c.l.b16 %v1156
        %v2372 = vunpack.c.l.b16 %v1166
        %v2373 = vunpack.c.l.b16 %v1180
        %v2374 = vunpack.c.l.b16 %v1190
        %v2375 = vunpack.c.l.b16 %v1204
        %v2376 = vunpack.c.l.b16 %v1214
        %v2377 = vunpack.c.l.b16 %v1228
        %v2378 = vunpack.c.l.b16 %v1238
        %v2379 = vpack.c.b16 %v2348, %v2347
        %v2380 = vpack.c.b16 %v2350, %v2349
        %v2381 = vpack.c.b16 %v2352, %v2351
        %v2382 = vpack.c.b16 %v2354, %v2353
        %v2383 = vpack.c.b16 %v2356, %v2355
        %v2384 = vpack.c.b16 %v2358, %v2357
        %v2385 = vpack.c.b16 %v2360, %v2359
        %v2386 = vpack.c.b16 %v2362, %v2361
        %v2387 = vpack.c.b16 %v2364, %v2363
        %v2388 = vpack.c.b16 %v2366, %v2365
        %v2389 = vpack.c.b16 %v2368, %v2367
        %v2390 = vpack.c.b16 %v2370, %v2369
        %v2391 = vpack.c.b16 %v2372, %v2371
        %v2392 = vpack.c.b16 %v2374, %v2373
        %v2393 = vpack.c.b16 %v2376, %v2375
        %v2394 = vpack.c.b16 %v2378, %v2377
        %2395 = vrot.lane.b32.xlu0 %v2379, 16
        %v2396 = vpop.permute.xlu0 %2395
        %2397 = vrot.lane.b32.xlu0 %v2380, 16
        %v2398 = vpop.permute.xlu0 %2397
        %2399 = vrot.lane.b32.xlu0 %v2381, 16
        %v2400 = vpop.permute.xlu0 %2399
        %2401 = vrot.lane.b32.xlu0 %v2382, 16
        %v2402 = vpop.permute.xlu0 %2401
        %2403 = vrot.lane.b32.xlu0 %v2383, 16
        %v2404 = vpop.permute.xlu0 %2403
        %2405 = vrot.lane.b32.xlu0 %v2384, 16
        %v2406 = vpop.permute.xlu0 %2405
        %2407 = vrot.lane.b32.xlu0 %v2385, 16
        %v2408 = vpop.permute.xlu0 %2407
        %2409 = vrot.lane.b32.xlu0 %v2386, 16
        %v2410 = vpop.permute.xlu0 %2409
        %2411 = vrot.lane.b32.xlu0 %v2387, 16
        %v2412 = vpop.permute.xlu0 %2411
        %2413 = vrot.lane.b32.xlu0 %v2388, 16
        %v2414 = vpop.permute.xlu0 %2413
        %2415 = vrot.lane.b32.xlu0 %v2389, 16
        %v2416 = vpop.permute.xlu0 %2415
        %2417 = vrot.lane.b32.xlu0 %v2390, 16
        %v2418 = vpop.permute.xlu0 %2417
        %2419 = vrot.lane.b32.xlu0 %v2391, 16
        %v2420 = vpop.permute.xlu0 %2419
        %2421 = vrot.lane.b32.xlu0 %v2392, 16
        %v2422 = vpop.permute.xlu0 %2421
        %2423 = vrot.lane.b32.xlu0 %v2393, 16
        %v2424 = vpop.permute.xlu0 %2423
        %2425 = vrot.lane.b32.xlu0 %v2394, 16
        %v2426 = vpop.permute.xlu0 %2425
        %v2427 = vunpack.c.l.b16 %v1306
        %v2428 = vunpack.c.l.b16 %v1309
        %v2429 = vunpack.c.l.b16 %v1313
        %v2430 = vunpack.c.l.b16 %v1316
        %v2431 = vunpack.c.l.b16 %v1320
        %v2432 = vunpack.c.l.b16 %v1323
        %v2433 = vunpack.c.l.b16 %v1327
        %v2434 = vunpack.c.l.b16 %v1330
        %v2435 = vunpack.c.l.b16 %v1334
        %v2436 = vunpack.c.l.b16 %v1337
        %v2437 = vunpack.c.l.b16 %v1341
        %v2438 = vunpack.c.l.b16 %v1344
        %v2439 = vunpack.c.l.b16 %v1348
        %v2440 = vunpack.c.l.b16 %v1351
        %v2441 = vunpack.c.l.b16 %v1355
        %v2442 = vunpack.c.l.b16 %v1358
        %v2443 = vunpack.c.l.b16 %v1362
        %v2444 = vunpack.c.l.b16 %v1365
        %v2445 = vunpack.c.l.b16 %v1369
        %v2446 = vunpack.c.l.b16 %v1372
        %v2447 = vunpack.c.l.b16 %v1376
        %v2448 = vunpack.c.l.b16 %v1379
        %v2449 = vunpack.c.l.b16 %v1383
        %v2450 = vunpack.c.l.b16 %v1386
        %v2451 = vunpack.c.l.b16 %v1390
        %v2452 = vunpack.c.l.b16 %v1393
        %v2453 = vunpack.c.l.b16 %v1397
        %v2454 = vunpack.c.l.b16 %v1400
        %v2455 = vunpack.c.l.b16 %v1404
        %v2456 = vunpack.c.l.b16 %v1407
        %v2457 = vunpack.c.l.b16 %v1411
        %v2458 = vunpack.c.l.b16 %v1414
        %v2459 = vpack.c.b16 %v2428, %v2427
        %v2460 = vpack.c.b16 %v2430, %v2429
        %v2461 = vpack.c.b16 %v2432, %v2431
        %v2462 = vpack.c.b16 %v2434, %v2433
        %v2463 = vpack.c.b16 %v2436, %v2435
        %v2464 = vpack.c.b16 %v2438, %v2437
        %v2465 = vpack.c.b16 %v2440, %v2439
        %v2466 = vpack.c.b16 %v2442, %v2441
        %v2467 = vpack.c.b16 %v2444, %v2443
        %v2468 = vpack.c.b16 %v2446, %v2445
        %v2469 = vpack.c.b16 %v2448, %v2447
        %v2470 = vpack.c.b16 %v2450, %v2449
        %v2471 = vpack.c.b16 %v2452, %v2451
        %v2472 = vpack.c.b16 %v2454, %v2453
        %v2473 = vpack.c.b16 %v2456, %v2455
        %v2474 = vpack.c.b16 %v2458, %v2457
        %2475 = vrot.lane.b32.xlu0 %v2459, 20
        %v2476 = vpop.permute.xlu0 %2475
        %2477 = vrot.lane.b32.xlu0 %v2460, 20
        %v2478 = vpop.permute.xlu0 %2477
        %2479 = vrot.lane.b32.xlu0 %v2461, 20
        %v2480 = vpop.permute.xlu0 %2479
        %2481 = vrot.lane.b32.xlu0 %v2462, 20
        %v2482 = vpop.permute.xlu0 %2481
        %2483 = vrot.lane.b32.xlu0 %v2463, 20
        %v2484 = vpop.permute.xlu0 %2483
        %2485 = vrot.lane.b32.xlu0 %v2464, 20
        %v2486 = vpop.permute.xlu0 %2485
        %2487 = vrot.lane.b32.xlu0 %v2465, 20
        %v2488 = vpop.permute.xlu0 %2487
        %2489 = vrot.lane.b32.xlu0 %v2466, 20
        %v2490 = vpop.permute.xlu0 %2489
        %2491 = vrot.lane.b32.xlu0 %v2467, 20
        %v2492 = vpop.permute.xlu0 %2491
        %2493 = vrot.lane.b32.xlu0 %v2468, 20
        %v2494 = vpop.permute.xlu0 %2493
        %2495 = vrot.lane.b32.xlu0 %v2469, 20
        %v2496 = vpop.permute.xlu0 %2495
        %2497 = vrot.lane.b32.xlu0 %v2470, 20
        %v2498 = vpop.permute.xlu0 %2497
        %2499 = vrot.lane.b32.xlu0 %v2471, 20
        %v2500 = vpop.permute.xlu0 %2499
        %2501 = vrot.lane.b32.xlu0 %v2472, 20
        %v2502 = vpop.permute.xlu0 %2501
        %2503 = vrot.lane.b32.xlu0 %v2473, 20
        %v2504 = vpop.permute.xlu0 %2503
        %2505 = vrot.lane.b32.xlu0 %v2474, 20
        %v2506 = vpop.permute.xlu0 %2505
        %v2523 = vunpack.c.l.b16 %v1419
        %v2524 = vunpack.c.l.b16 %v1420
        %v2525 = vunpack.c.l.b16 %v1421
        %v2526 = vunpack.c.l.b16 %v1422
        %v2527 = vunpack.c.l.b16 %v1423
        %v2528 = vunpack.c.l.b16 %v1424
        %v2529 = vunpack.c.l.b16 %v1425
        %v2530 = vunpack.c.l.b16 %v1426
        %v2531 = vunpack.c.l.b16 %v1427
        %v2532 = vunpack.c.l.b16 %v1428
        %v2533 = vunpack.c.l.b16 %v1429
        %v2534 = vunpack.c.l.b16 %v1430
        %v2535 = vunpack.c.l.b16 %v1431
        %v2536 = vunpack.c.l.b16 %v1432
        %v2537 = vunpack.c.l.b16 %v1433
        %v2538 = vunpack.c.l.b16 %v1434
        %v2539 = vunpack.c.l.b16 %v1435
        %v2540 = vunpack.c.l.b16 %v1436
        %v2541 = vunpack.c.l.b16 %v1437
        %v2542 = vunpack.c.l.b16 %v1438
        %v2543 = vunpack.c.l.b16 %v1439
        %v2544 = vunpack.c.l.b16 %v1440
        %v2545 = vunpack.c.l.b16 %v1441
        %v2546 = vunpack.c.l.b16 %v1442
        %v2547 = vunpack.c.l.b16 %v1443
        %v2548 = vunpack.c.l.b16 %v1444
        %v2549 = vunpack.c.l.b16 %v1445
        %v2550 = vunpack.c.l.b16 %v1446
        %v2551 = vunpack.c.l.b16 %v1447
        %v2552 = vunpack.c.l.b16 %v1448
        %v2553 = vunpack.c.l.b16 %v1449
        %v2554 = vunpack.c.l.b16 %v1450
        %v2555 = vpack.c.b16 %v2524, %v2523
        %v2556 = vpack.c.b16 %v2526, %v2525
        %v2557 = vpack.c.b16 %v2528, %v2527
        %v2558 = vpack.c.b16 %v2530, %v2529
        %v2559 = vpack.c.b16 %v2532, %v2531
        %v2560 = vpack.c.b16 %v2534, %v2533
        %v2561 = vpack.c.b16 %v2536, %v2535
        %v2562 = vpack.c.b16 %v2538, %v2537
        %v2563 = vpack.c.b16 %v2540, %v2539
        %v2564 = vpack.c.b16 %v2542, %v2541
        %v2565 = vpack.c.b16 %v2544, %v2543
        %v2566 = vpack.c.b16 %v2546, %v2545
        %v2567 = vpack.c.b16 %v2548, %v2547
        %v2568 = vpack.c.b16 %v2550, %v2549
        %v2569 = vpack.c.b16 %v2552, %v2551
        %v2570 = vpack.c.b16 %v2554, %v2553
        %2571 = vrot.lane.b32.xlu0 %v2555, 24
        %v2572 = vpop.permute.xlu0 %2571
        %2573 = vrot.lane.b32.xlu0 %v2556, 24
        %v2574 = vpop.permute.xlu0 %2573
        %2575 = vrot.lane.b32.xlu0 %v2557, 24
        %v2576 = vpop.permute.xlu0 %2575
        %2577 = vrot.lane.b32.xlu0 %v2558, 24
        %v2578 = vpop.permute.xlu0 %2577
        %2579 = vrot.lane.b32.xlu0 %v2559, 24
        %v2580 = vpop.permute.xlu0 %2579
        %2581 = vrot.lane.b32.xlu0 %v2560, 24
        %v2582 = vpop.permute.xlu0 %2581
        %2583 = vrot.lane.b32.xlu0 %v2561, 24
        %v2584 = vpop.permute.xlu0 %2583
        %2585 = vrot.lane.b32.xlu0 %v2562, 24
        %v2586 = vpop.permute.xlu0 %2585
        %2587 = vrot.lane.b32.xlu0 %v2563, 24
        %v2588 = vpop.permute.xlu0 %2587
        %2589 = vrot.lane.b32.xlu0 %v2564, 24
        %v2590 = vpop.permute.xlu0 %2589
        %2591 = vrot.lane.b32.xlu0 %v2565, 24
        %v2592 = vpop.permute.xlu0 %2591
        %2593 = vrot.lane.b32.xlu0 %v2566, 24
        %v2594 = vpop.permute.xlu0 %2593
        %2595 = vrot.lane.b32.xlu0 %v2567, 24
        %v2596 = vpop.permute.xlu0 %2595
        %2597 = vrot.lane.b32.xlu0 %v2568, 24
        %v2598 = vpop.permute.xlu0 %2597
        %2599 = vrot.lane.b32.xlu0 %v2569, 24
        %v2600 = vpop.permute.xlu0 %2599
        %2601 = vrot.lane.b32.xlu0 %v2570, 24
        %v2602 = vpop.permute.xlu0 %2601
        %v2603 = vunpack.c.l.b16 %v1480
        %v2604 = vunpack.c.l.b16 %v1490
        %v2605 = vunpack.c.l.b16 %v1504
        %v2606 = vunpack.c.l.b16 %v1514
        %v2607 = vunpack.c.l.b16 %v1528
        %v2608 = vunpack.c.l.b16 %v1538
        %v2609 = vunpack.c.l.b16 %v1552
        %v2610 = vunpack.c.l.b16 %v1562
        %v2611 = vunpack.c.l.b16 %v1576
        %v2612 = vunpack.c.l.b16 %v1586
        %v2613 = vunpack.c.l.b16 %v1600
        %v2614 = vunpack.c.l.b16 %v1610
        %v2615 = vunpack.c.l.b16 %v1624
        %v2616 = vunpack.c.l.b16 %v1634
        %v2617 = vunpack.c.l.b16 %v1648
        %v2618 = vunpack.c.l.b16 %v1658
        %v2619 = vunpack.c.l.b16 %v1672
        %v2620 = vunpack.c.l.b16 %v1682
        %v2621 = vunpack.c.l.b16 %v1696
        %v2622 = vunpack.c.l.b16 %v1706
        %v2623 = vunpack.c.l.b16 %v1720
        %v2624 = vunpack.c.l.b16 %v1730
        %v2625 = vunpack.c.l.b16 %v1744
        %v2626 = vunpack.c.l.b16 %v1754
        %v2627 = vunpack.c.l.b16 %v1768
        %v2628 = vunpack.c.l.b16 %v1778
        %v2629 = vunpack.c.l.b16 %v1792
        %v2630 = vunpack.c.l.b16 %v1802
        %v2631 = vunpack.c.l.b16 %v1816
        %v2632 = vunpack.c.l.b16 %v1826
        %v2633 = vunpack.c.l.b16 %v1840
        %v2634 = vunpack.c.l.b16 %v1850
        %v2635 = vpack.c.b16 %v2604, %v2603
        %v2636 = vpack.c.b16 %v2606, %v2605
        %v2637 = vpack.c.b16 %v2608, %v2607
        %v2638 = vpack.c.b16 %v2610, %v2609
        %v2639 = vpack.c.b16 %v2612, %v2611
        %v2640 = vpack.c.b16 %v2614, %v2613
        %v2641 = vpack.c.b16 %v2616, %v2615
        %v2642 = vpack.c.b16 %v2618, %v2617
        %v2643 = vpack.c.b16 %v2620, %v2619
        %v2644 = vpack.c.b16 %v2622, %v2621
        %v2645 = vpack.c.b16 %v2624, %v2623
        %v2646 = vpack.c.b16 %v2626, %v2625
        %v2647 = vpack.c.b16 %v2628, %v2627
        %v2648 = vpack.c.b16 %v2630, %v2629
        %v2649 = vpack.c.b16 %v2632, %v2631
        %v2650 = vpack.c.b16 %v2634, %v2633
        %2651 = vrot.lane.b32.xlu0 %v2635, 28
        %v2652 = vpop.permute.xlu0 %2651
        %2653 = vrot.lane.b32.xlu0 %v2636, 28
        %v2654 = vpop.permute.xlu0 %2653
        %2655 = vrot.lane.b32.xlu0 %v2637, 28
        %v2656 = vpop.permute.xlu0 %2655
        %2657 = vrot.lane.b32.xlu0 %v2638, 28
        %v2658 = vpop.permute.xlu0 %2657
        %2659 = vrot.lane.b32.xlu0 %v2639, 28
        %v2660 = vpop.permute.xlu0 %2659
        %2661 = vrot.lane.b32.xlu0 %v2640, 28
        %v2662 = vpop.permute.xlu0 %2661
        %2663 = vrot.lane.b32.xlu0 %v2641, 28
        %v2664 = vpop.permute.xlu0 %2663
        %2665 = vrot.lane.b32.xlu0 %v2642, 28
        %v2666 = vpop.permute.xlu0 %2665
        %2667 = vrot.lane.b32.xlu0 %v2643, 28
        %v2668 = vpop.permute.xlu0 %2667
        %2669 = vrot.lane.b32.xlu0 %v2644, 28
        %v2670 = vpop.permute.xlu0 %2669
        %2671 = vrot.lane.b32.xlu0 %v2645, 28
        %v2672 = vpop.permute.xlu0 %2671
        %2673 = vrot.lane.b32.xlu0 %v2646, 28
        %v2674 = vpop.permute.xlu0 %2673
        %2675 = vrot.lane.b32.xlu0 %v2647, 28
        %v2676 = vpop.permute.xlu0 %2675
        %2677 = vrot.lane.b32.xlu0 %v2648, 28
        %v2678 = vpop.permute.xlu0 %2677
        %2679 = vrot.lane.b32.xlu0 %v2649, 28
        %v2680 = vpop.permute.xlu0 %2679
        %2681 = vrot.lane.b32.xlu0 %v2650, 28
        %v2682 = vpop.permute.xlu0 %2681
        %v2683 = vunpack.c.l.b16 %v1918
        %v2684 = vunpack.c.l.b16 %v1921
        %v2685 = vunpack.c.l.b16 %v1925
        %v2686 = vunpack.c.l.b16 %v1928
        %v2687 = vunpack.c.l.b16 %v1932
        %v2688 = vunpack.c.l.b16 %v1935
        %v2689 = vunpack.c.l.b16 %v1939
        %v2690 = vunpack.c.l.b16 %v1942
        %v2691 = vunpack.c.l.b16 %v1946
        %v2692 = vunpack.c.l.b16 %v1949
        %v2693 = vunpack.c.l.b16 %v1953
        %v2694 = vunpack.c.l.b16 %v1956
        %v2695 = vunpack.c.l.b16 %v1960
        %v2696 = vunpack.c.l.b16 %v1963
        %v2697 = vunpack.c.l.b16 %v1967
        %v2698 = vunpack.c.l.b16 %v1970
        %v2699 = vunpack.c.l.b16 %v1974
        %v2700 = vunpack.c.l.b16 %v1977
        %v2701 = vunpack.c.l.b16 %v1981
        %v2702 = vunpack.c.l.b16 %v1984
        %v2703 = vunpack.c.l.b16 %v1988
        %v2704 = vunpack.c.l.b16 %v1991
        %v2705 = vunpack.c.l.b16 %v1995
        %v2706 = vunpack.c.l.b16 %v1998
        %v2707 = vunpack.c.l.b16 %v2002
        %v2708 = vunpack.c.l.b16 %v2005
        %v2709 = vunpack.c.l.b16 %v2009
        %v2710 = vunpack.c.l.b16 %v2012
        %v2711 = vunpack.c.l.b16 %v2016
        %v2712 = vunpack.c.l.b16 %v2019
        %v2713 = vunpack.c.l.b16 %v2023
        %v2714 = vunpack.c.l.b16 %v2026
        %v2715 = vpack.c.b16 %v2684, %v2683
        %v2716 = vpack.c.b16 %v2686, %v2685
        %v2717 = vpack.c.b16 %v2688, %v2687
        %v2718 = vpack.c.b16 %v2690, %v2689
        %v2719 = vpack.c.b16 %v2692, %v2691
        %v2720 = vpack.c.b16 %v2694, %v2693
        %v2721 = vpack.c.b16 %v2696, %v2695
        %v2722 = vpack.c.b16 %v2698, %v2697
        %v2723 = vpack.c.b16 %v2700, %v2699
        %v2724 = vpack.c.b16 %v2702, %v2701
        %v2725 = vpack.c.b16 %v2704, %v2703
        %v2726 = vpack.c.b16 %v2706, %v2705
        %v2727 = vpack.c.b16 %v2708, %v2707
        %v2728 = vpack.c.b16 %v2710, %v2709
        %v2729 = vpack.c.b16 %v2712, %v2711
        %v2730 = vpack.c.b16 %v2714, %v2713
        %2731 = vrot.lane.b32.xlu0 %v2715, 32
        %v2732 = vpop.permute.xlu0 %2731
        %2733 = vrot.lane.b32.xlu0 %v2716, 32
        %v2734 = vpop.permute.xlu0 %2733
        %2735 = vrot.lane.b32.xlu0 %v2717, 32
        %v2736 = vpop.permute.xlu0 %2735
        %2737 = vrot.lane.b32.xlu0 %v2718, 32
        %v2738 = vpop.permute.xlu0 %2737
        %2739 = vrot.lane.b32.xlu0 %v2719, 32
        %v2740 = vpop.permute.xlu0 %2739
        %2741 = vrot.lane.b32.xlu0 %v2720, 32
        %v2742 = vpop.permute.xlu0 %2741
        %2743 = vrot.lane.b32.xlu0 %v2721, 32
        %v2744 = vpop.permute.xlu0 %2743
        %2745 = vrot.lane.b32.xlu0 %v2722, 32
        %v2746 = vpop.permute.xlu0 %2745
        %2747 = vrot.lane.b32.xlu0 %v2723, 32
        %v2748 = vpop.permute.xlu0 %2747
        %2749 = vrot.lane.b32.xlu0 %v2724, 32
        %v2750 = vpop.permute.xlu0 %2749
        %2751 = vrot.lane.b32.xlu0 %v2725, 32
        %v2752 = vpop.permute.xlu0 %2751
        %2753 = vrot.lane.b32.xlu0 %v2726, 32
        %v2754 = vpop.permute.xlu0 %2753
        %2755 = vrot.lane.b32.xlu0 %v2727, 32
        %v2756 = vpop.permute.xlu0 %2755
        %2757 = vrot.lane.b32.xlu0 %v2728, 32
        %v2758 = vpop.permute.xlu0 %2757
        %2759 = vrot.lane.b32.xlu0 %v2729, 32
        %v2760 = vpop.permute.xlu0 %2759
        %2761 = vrot.lane.b32.xlu0 %v2730, 32
        %v2762 = vpop.permute.xlu0 %2761
        %vm2763 = vcmask 31744
        %v2766 = vsel %vm2763, %v2075, %v2140
        %v2769 = vsel %vm2763, %v2076, %v2142
        %v2772 = vsel %vm2763, %v2077, %v2144
        %v2775 = vsel %vm2763, %v2078, %v2146
        %v2778 = vsel %vm2763, %v2079, %v2148
        %v2781 = vsel %vm2763, %v2080, %v2150
        %v2784 = vsel %vm2763, %v2081, %v2152
        %v2787 = vsel %vm2763, %v2082, %v2154
        %v2790 = vsel %vm2763, %v2083, %v2156
        %v2793 = vsel %vm2763, %v2084, %v2158
        %v2796 = vsel %vm2763, %v2085, %v2160
        %v2799 = vsel %vm2763, %v2086, %v2162
        %v2802 = vsel %vm2763, %v2087, %v2164
        %v2805 = vsel %vm2763, %v2088, %v2166
        %v2808 = vsel %vm2763, %v2089, %v2168
        %v2811 = vsel %vm2763, %v2090, %v2170
        %vm2812 = vcmask 64512
        %v2814 = vsel %vm2812, %v2766, %v2220
        %v2816 = vsel %vm2812, %v2769, %v2222
        %v2818 = vsel %vm2812, %v2772, %v2224
        %v2820 = vsel %vm2812, %v2775, %v2226
        %v2822 = vsel %vm2812, %v2778, %v2228
        %v2824 = vsel %vm2812, %v2781, %v2230
        %v2826 = vsel %vm2812, %v2784, %v2232
        %v2828 = vsel %vm2812, %v2787, %v2234
        %v2830 = vsel %vm2812, %v2790, %v2236
        %v2832 = vsel %vm2812, %v2793, %v2238
        %v2834 = vsel %vm2812, %v2796, %v2240
        %v2836 = vsel %vm2812, %v2799, %v2242
        %v2838 = vsel %vm2812, %v2802, %v2244
        %v2840 = vsel %vm2812, %v2805, %v2246
        %v2842 = vsel %vm2812, %v2808, %v2248
        %v2844 = vsel %vm2812, %v2811, %v2250
        %vm2845 = vcmask 97280
        %v2847 = vsel %vm2845, %v2814, %v2316
        %v2849 = vsel %vm2845, %v2816, %v2318
        %v2851 = vsel %vm2845, %v2818, %v2320
        %v2853 = vsel %vm2845, %v2820, %v2322
        %v2855 = vsel %vm2845, %v2822, %v2324
        %v2857 = vsel %vm2845, %v2824, %v2326
        %v2859 = vsel %vm2845, %v2826, %v2328
        %v2861 = vsel %vm2845, %v2828, %v2330
        %v2863 = vsel %vm2845, %v2830, %v2332
        %v2865 = vsel %vm2845, %v2832, %v2334
        %v2867 = vsel %vm2845, %v2834, %v2336
        %v2869 = vsel %vm2845, %v2836, %v2338
        %v2871 = vsel %vm2845, %v2838, %v2340
        %v2873 = vsel %vm2845, %v2840, %v2342
        %v2875 = vsel %vm2845, %v2842, %v2344
        %v2877 = vsel %vm2845, %v2844, %v2346
        %vm2878 = vcmask 130048
        %v2880 = vsel %vm2878, %v2847, %v2396
        %v2882 = vsel %vm2878, %v2849, %v2398
        %v2884 = vsel %vm2878, %v2851, %v2400
        %v2886 = vsel %vm2878, %v2853, %v2402
        %v2888 = vsel %vm2878, %v2855, %v2404
        %v2890 = vsel %vm2878, %v2857, %v2406
        %v2892 = vsel %vm2878, %v2859, %v2408
        %v2894 = vsel %vm2878, %v2861, %v2410
        %v2896 = vsel %vm2878, %v2863, %v2412
        %v2898 = vsel %vm2878, %v2865, %v2414
        %v2900 = vsel %vm2878, %v2867, %v2416
        %v2902 = vsel %vm2878, %v2869, %v2418
        %v2904 = vsel %vm2878, %v2871, %v2420
        %v2906 = vsel %vm2878, %v2873, %v2422
        %v2908 = vsel %vm2878, %v2875, %v2424
        %v2910 = vsel %vm2878, %v2877, %v2426
        %vm2911 = vcmask 162816
        %v2913 = vsel %vm2911, %v2880, %v2476
        %v2915 = vsel %vm2911, %v2882, %v2478
        %v2917 = vsel %vm2911, %v2884, %v2480
        %v2919 = vsel %vm2911, %v2886, %v2482
        %v2921 = vsel %vm2911, %v2888, %v2484
        %v2923 = vsel %vm2911, %v2890, %v2486
        %v2925 = vsel %vm2911, %v2892, %v2488
        %v2927 = vsel %vm2911, %v2894, %v2490
        %v2929 = vsel %vm2911, %v2896, %v2492
        %v2931 = vsel %vm2911, %v2898, %v2494
        %v2933 = vsel %vm2911, %v2900, %v2496
        %v2935 = vsel %vm2911, %v2902, %v2498
        %v2937 = vsel %vm2911, %v2904, %v2500
        %v2939 = vsel %vm2911, %v2906, %v2502
        %v2941 = vsel %vm2911, %v2908, %v2504
        %v2943 = vsel %vm2911, %v2910, %v2506
        %vm2944 = vcmask 195584
        %v2946 = vsel %vm2944, %v2913, %v2572
        %v2948 = vsel %vm2944, %v2915, %v2574
        %v2950 = vsel %vm2944, %v2917, %v2576
        %v2952 = vsel %vm2944, %v2919, %v2578
        %v2954 = vsel %vm2944, %v2921, %v2580
        %v2956 = vsel %vm2944, %v2923, %v2582
        %v2958 = vsel %vm2944, %v2925, %v2584
        %v2960 = vsel %vm2944, %v2927, %v2586
        %v2962 = vsel %vm2944, %v2929, %v2588
        %v2964 = vsel %vm2944, %v2931, %v2590
        %v2966 = vsel %vm2944, %v2933, %v2592
        %v2968 = vsel %vm2944, %v2935, %v2594
        %v2970 = vsel %vm2944, %v2937, %v2596
        %v2972 = vsel %vm2944, %v2939, %v2598
        %v2974 = vsel %vm2944, %v2941, %v2600
        %v2976 = vsel %vm2944, %v2943, %v2602
        %vm2977 = vcmask 228352
        %v2979 = vsel %vm2977, %v2946, %v2652
        %v2981 = vsel %vm2977, %v2948, %v2654
        %v2983 = vsel %vm2977, %v2950, %v2656
        %v2985 = vsel %vm2977, %v2952, %v2658
        %v2987 = vsel %vm2977, %v2954, %v2660
        %v2989 = vsel %vm2977, %v2956, %v2662
        %v2991 = vsel %vm2977, %v2958, %v2664
        %v2993 = vsel %vm2977, %v2960, %v2666
        %v2995 = vsel %vm2977, %v2962, %v2668
        %v2997 = vsel %vm2977, %v2964, %v2670
        %v2999 = vsel %vm2977, %v2966, %v2672
        %v3001 = vsel %vm2977, %v2968, %v2674
        %v3003 = vsel %vm2977, %v2970, %v2676
        %v3005 = vsel %vm2977, %v2972, %v2678
        %v3007 = vsel %vm2977, %v2974, %v2680
        %v3009 = vsel %vm2977, %v2976, %v2682
        %vm3010 = vcmask 261120
        %v3012 = vsel %vm3010, %v2979, %v2732
        %v3014 = vsel %vm3010, %v2981, %v2734
        %v3016 = vsel %vm3010, %v2983, %v2736
        %v3018 = vsel %vm3010, %v2985, %v2738
        %v3020 = vsel %vm3010, %v2987, %v2740
        %v3022 = vsel %vm3010, %v2989, %v2742
        %v3024 = vsel %vm3010, %v2991, %v2744
        %v3026 = vsel %vm3010, %v2993, %v2746
        %v3028 = vsel %vm3010, %v2995, %v2748
        %v3030 = vsel %vm3010, %v2997, %v2750
        %v3032 = vsel %vm3010, %v2999, %v2752
        %v3034 = vsel %vm3010, %v3001, %v2754
        %v3036 = vsel %vm3010, %v3003, %v2756
        %v3038 = vsel %vm3010, %v3005, %v2758
        %v3040 = vsel %vm3010, %v3007, %v2760
        %v3042 = vsel %vm3010, %v3009, %v2762
        %v3043 = vld [vmem:[%s1] sm:$0xf]
        %v3044 = vld [vmem:[%s2] sm:$0xff]
        %3046 = vset.pattern.permute.xlu0 0
        %3047 = vperm.xlu0 %3046, %v3044
        %v3048 = vpop.permute.xlu0 %3047
        %vm3050 = vcmask 293888
        %v3052 = vsel %vm3050, %v3043, 0
        %v3054 = vsel %vm3050, %v3012, 0
        %v3056 = vsel %vm3050, %v3014, 0
        %v3058 = vsel %vm3050, %v3016, 0
        %v3060 = vsel %vm3050, %v3018, 0
        %v3062 = vsel %vm3050, %v3020, 0
        %v3064 = vsel %vm3050, %v3022, 0
        %v3066 = vsel %vm3050, %v3024, 0
        %v3068 = vsel %vm3050, %v3026, 0
        %v3070 = vsel %vm3050, %v3028, 0
        %v3072 = vsel %vm3050, %v3030, 0
        %v3074 = vsel %vm3050, %v3032, 0
        %v3076 = vsel %vm3050, %v3034, 0
        %v3078 = vsel %vm3050, %v3036, 0
        %v3080 = vsel %vm3050, %v3038, 0
        %v3082 = vsel %vm3050, %v3040, 0
        %v3084 = vsel %vm3050, %v3042, 0
        %3086 = vmatprep.subr.bf16.mxu0 0
        %3087 = vmatpush1.bf16.xpose.msra.mxu0 %v3054
        %3088 = vmatprep.subr.bf16.mxu0 0
        %3089 = vmatpush1.bf16.xpose.msra.mxu0 %v3056
        %3090 = vmatprep.subr.bf16.mxu0 0
        %3091 = vmatpush1.bf16.xpose.msra.mxu0 %v3058
        %3092 = vmatprep.subr.bf16.mxu0 0
        %3093 = vmatpush1.bf16.xpose.msra.mxu0 %v3060
        %3094 = vmatprep.subr.bf16.mxu0 0
        %3095 = vmatpush1.bf16.xpose.msra.mxu0 %v3062
        %3096 = vmatprep.subr.bf16.mxu0 0
        %3097 = vmatpush1.bf16.xpose.msra.mxu0 %v3064
        %3098 = vmatprep.subr.bf16.mxu0 0
        %3099 = vmatpush1.bf16.xpose.msra.mxu0 %v3066
        %3100 = vmatprep.subr.bf16.mxu0 0
        %3101 = vmatpush1.bf16.xpose.msra.mxu0 %v3068
        %3102 = vmatprep.subr.bf16.mxu0 0
        %3103 = vmatpush1.bf16.xpose.msra.mxu0 %v3070
        %3104 = vmatprep.subr.bf16.mxu0 0
        %3105 = vmatpush1.bf16.xpose.msra.mxu0 %v3072
        %3106 = vmatprep.subr.bf16.mxu0 0
        %3107 = vmatpush1.bf16.xpose.msra.mxu0 %v3074
        %3108 = vmatprep.subr.bf16.mxu0 0
        %3109 = vmatpush1.bf16.xpose.msra.mxu0 %v3076
        %3110 = vmatprep.subr.bf16.mxu0 0
        %3111 = vmatpush1.bf16.xpose.msra.mxu0 %v3078
        %3112 = vmatprep.subr.bf16.mxu0 0
        %3113 = vmatpush1.bf16.xpose.msra.mxu0 %v3080
        %3114 = vmatprep.subr.bf16.mxu0 0
        %3115 = vmatpush1.bf16.xpose.msra.mxu0 %v3082
        %3116 = vmatprep.subr.bf16.mxu0 0
        %3117 = vmatpush1.bf16.xpose.msra.mxu0 %v3084
        %3118 = vmatprep.mubr.bf16.mxu0 0
        %3119 = vmatmul.mubr.bf16.gmra.mrb[0].mxu0 %v3052
        %v3120 = vpop.f32.mrb[0].mxu0
        %v3121 = vadd.f32 %v3048, %v3120
        %v3122 = vpop.f32.mrb[0].mxu0
        %v3123 = vadd.f32 %v3048, %v3122
        %v3124 = vpop.f32.mrb[0].mxu0
        %v3125 = vpop.f32.mrb[0].mxu0
        %3126 = vdwg.mxu0
        %3127 = vst [vmem:[%s177] sm:$0xff] %v3121
        %3128 = vst [vmem:[%s177 + $0x8] sm:$0xff] %v3123
        %s3129 = sand.u32 %s107, 1
        %s3130 = scalar_lea.sflag [#allocation3], %s3129
        %s3131 = sand.u32 %s107, 1
        %s3132 = smul.addr %s3131, 16
        %s3133 = scalar_lea.vmem [#allocation2], %s3132
        // Predicated region
        $region33: #{tpu_custom_call.1} parent=31 // pred_check
          %p3134 = pneg %p117
        $region34: #{tpu_custom_call.1} parent=31 // pred_check_branch
          %3136 = sbr.rel (%p3134) target = $region36
        $region35: #{tpu_custom_call.1} parent=31 // pred_region
          %s3137 = smul.u32 2, %s22
          %s3139 = ssub.s32 256, 256
          %3140 = vsyncadd %s3130, %s3139
          %s3141 = smul.addr %s21, 2
          %s3142 = sadd.s32 %s3137, %s3141
          %s3143 = smul.addr %s3142, 128
          %s3144 = scalar_lea.hbm %s3, %s3143
          %s3146 = sshll.u32 %s3133, 4
          %s3147 = int_to_ptr.vmem [resolvable:$true] %s3146
          %3149 = dma.vmem_to_hbm [thread:$0]  %s3147, 256, %s3144, %s3130
        $region36: #{tpu_custom_call.1} parent=31 // pred_fallthru
          _
      $region32: #{tpu_custom_call.1} parent=5 // pred_fallthru
        _
      %p3150 = scmp.le.s32.totalorder 2, %s12
      // Predicated region
      $region37: #{tpu_custom_call.1} parent=5 // pred_check
        %p3151 = pneg %p3150
      $region38: #{tpu_custom_call.1} parent=5 // pred_check_branch
        %3153 = sbr.rel (%p3151) target = $region40
      $region39: #{tpu_custom_call.1} parent=5 // pred_region
        %s3154 = ssub.s32 %s12, 2
        // Predicated region
        $region41: #{tpu_custom_call.1} parent=39 // pred_check
          %p3155 = pneg %p123
        $region42: #{tpu_custom_call.1} parent=39 // pred_check_branch
          %3157 = sbr.rel (%p3155) target = $region44
        $region43: #{tpu_custom_call.1} parent=39 // pred_region
          %s3158 = sand.u32 %s108, 1
          %s3159 = scalar_lea.sflag [#allocation3], %s3158
          %s3160 = sand.u32 %s108, 1
          %s3161 = smul.addr %s3160, 16
          %s3162 = scalar_lea.vmem [#allocation2], %s3161
          %3163 = dma.done %s3159, 256
        $region44: #{tpu_custom_call.1} parent=39 // pred_fallthru
          _
      $region40: #{tpu_custom_call.1} parent=5 // pred_fallthru
        _
    $region6: #{tpu_custom_call.1} parent=1 // loop_footer
      %s16 = sadd.s32 1, %s12
    $region7: #{tpu_custom_call.1} parent=1 // loop_footer_branch
      %11 = sbr.rel target = $region3
    $region8: #{tpu_custom_call.1} parent=1 // loop_exit
      _
    %3164 = vsyncpa [#allocation3], 1
    %s3165 = scalar_lea.sflag [#allocation3], 1
    %3166 = vsyncpa %s3165, 1

</llo_original>
